<compile_context>
chip_gen: v7x
topology: tpu7x:2x2x1
jax: 0.10.0
libtpu: 0.0.40
codegen_flags: <defaults>
</compile_context>

<pallas_src>
import functools
import math

import numpy as np
import jax
import jax.numpy as jnp
from jax import lax
from jax.experimental import pallas as pl
from jax.experimental.pallas import tpu as pltpu

_LANE = 128
_SUBLANE = 8


def _mha_kernel(*refs, scale, causal, H, D, tq, tk, has_bias, compute_dtype):
    if has_bias:
        q_ref, k_ref, v_ref, bias_ref, o_ref, q_sc, acc_sc, m_sc, l_sc = refs
    else:
        q_ref, k_ref, v_ref, o_ref, q_sc, acc_sc, m_sc, l_sc = refs
        bias_ref = None

    qi = pl.program_id(1)
    ki = pl.program_id(2)
    nk = pl.num_programs(2)

    @pl.when(ki == 0)
    def _init():
        m_sc[...] = jnp.full(m_sc.shape, -jnp.inf, dtype=jnp.float32)
        l_sc[...] = jnp.zeros(l_sc.shape, dtype=jnp.float32)
        acc_sc[...] = jnp.zeros(acc_sc.shape, dtype=jnp.float32)
        # Hoist softmax scaling (done in f32) and the compute-dtype cast out of the
        # KV loop: the q tile is resident across the whole ki axis.
        for h in range(H):
            qh = q_ref[0, :, h * D:(h + 1) * D].astype(jnp.float32) * jnp.float32(scale)
            q_sc[h] = qh.astype(compute_dtype)

    def _compute(apply_causal):
        # Per-tile additive bias, built once and shared across all heads.
        bias = None
        if has_bias:
            bias = bias_ref[0].astype(jnp.float32)            # (1, tk), row-broadcast
        if apply_causal:
            row = qi * tq + lax.broadcasted_iota(jnp.int32, (tq, tk), 0)
            col = ki * tk + lax.broadcasted_iota(jnp.int32, (tq, tk), 1)
            cmask = jnp.where(col > row, jnp.float32(-10000.0), jnp.float32(0.0))
            bias = cmask if bias is None else bias + cmask    # single add in head loop

        # TODO(synk): for very large H switch to lax.fori_loop over heads to bound
        # vreg live ranges (test/typical H <= 16 so the static unroll is fine).
        for h in range(H):
            lo, hi = h * D, (h + 1) * D
            q = q_sc[h]                                       # (tq, D), pre-scaled
            k = k_ref[0, :, lo:hi].astype(compute_dtype)      # (tk, D)
            v = v_ref[0, :, lo:hi].astype(compute_dtype)      # (tk, D)
            # scores = q @ k^T with no materialized transpose (contract last dims).
            s = lax.dot_general(q, k, (((1,), (1,)), ((), ())),
                                preferred_element_type=jnp.float32)   # (tq, tk) f32
            if bias is not None:
                s = s + bias
            # Online softmax update (f32 statistics).
            m_prev = m_sc[:, h:h + 1]                         # (tq, 1)
            m_new = jnp.maximum(m_prev, jnp.max(s, axis=-1, keepdims=True))
            alpha = jnp.exp(m_prev - m_new)
            p = jnp.exp(s - m_new)
            l_sc[:, h:h + 1] = alpha * l_sc[:, h:h + 1] + jnp.sum(p, axis=-1, keepdims=True)
            acc_sc[h] = alpha * acc_sc[h] + jnp.dot(
                p.astype(compute_dtype), v, preferred_element_type=jnp.float32)
            m_sc[:, h:h + 1] = m_new

    if causal:
        row_lo = qi * tq
        row_hi = qi * tq + (tq - 1)
        col_lo = ki * tk
        col_hi = ki * tk + (tk - 1)

        @pl.when(col_hi <= row_lo)                            # fully visible: no mask math
        def _():
            _compute(apply_causal=False)

        @pl.when(jnp.logical_and(col_hi > row_lo, col_lo <= row_hi))   # diagonal straddle
        def _():
            _compute(apply_causal=True)
        # Tiles with col_lo > row_hi are fully masked: no compute, and the k/v
        # index_map clamps them onto an already-resident block (no DMA either).
    else:
        _compute(apply_causal=False)

    @pl.when(ki == nk - 1)
    def _finalize():
        for h in range(H):
            # approx reciprocal (EUP slot, ~free); ~1e-3 rel error, forward-only use.
            inv_l = pl.reciprocal(l_sc[:, h:h + 1], approx=True)
            o_ref[0, :, h * D:(h + 1) * D] = (acc_sc[h] * inv_l).astype(o_ref.dtype)


def _round_up(x, m):
    return ((x + m - 1) // m) * m


def _vmem_limit_bytes():
    cap = None
    try:
        cap = getattr(pltpu.get_tpu_info(), "vmem_capacity_bytes", None)
    except Exception:
        cap = None
    if cap is None:
        cap = 64 * 1024 * 1024            # conservative default (v7x: 64 MiB / core)
    if cap >= 100 * 1024 * 1024:
        return 96 * 1024 * 1024           # v5e / v6e (128 MiB physical VMEM)
    return 40 * 1024 * 1024               # v7x (64 MiB physical VMEM)


def _tile_candidates(S, cap=512):
    divs = [d for d in range(1, min(S, cap) + 1) if S % d == 0]
    a128 = sorted([d for d in divs if d % _LANE == 0], reverse=True)
    a8 = sorted([d for d in divs if d % _SUBLANE == 0 and d % _LANE != 0], reverse=True)
    cands = a128 + a8
    if S not in cands:
        # Last resort: the full sequence as one block (always a legal block shape).
        # TODO(synk): pad S in the wrapper for large sequences not divisible by 8.
        cands = cands + [S]
    return cands


def _vmem_footprint(tq, tk, H, D, HD, b_in, b_cmp):
    """Approximate VMEM bytes: double-buffered I/O blocks + persistent scratch."""
    pad_l = lambda n: _round_up(n, _LANE)
    pad_s = lambda n: _round_up(n, _SUBLANE)
    io = 2 * pad_s(tq) * HD * b_in            # q block (double buffered)
    io += 2 * 2 * pad_s(tk) * HD * b_in       # k and v blocks
    io += 2 * pad_s(tq) * HD * b_in           # output block
    io += 2 * _SUBLANE * pad_l(tk) * 4        # key-padding bias block
    scratch = H * pad_s(tq) * pad_l(D) * b_cmp    # pre-scaled q
    scratch += H * pad_s(tq) * pad_l(D) * 4       # f32 accumulator
    scratch += 2 * pad_s(tq) * pad_l(H) * 4       # m / l statistics
    return io + scratch


def _pick_tiles(S, H, D, HD, b_in, b_cmp, budget, has_bias, block_q, block_k):
    cands = _tile_candidates(S)
    tq_cands = [block_q] if block_q is not None else cands
    if block_k is not None:
        tk_cands = [block_k]
    else:
        tk_cands = cands
        if has_bias:  # key-padding bias block needs a 128-aligned (or full-S) KV tile
            tk_cands = [d for d in cands if d % _LANE == 0 or d == S] or [S]
    # Keep tq as large as possible (arithmetic intensity), shrink tk first;
    # avoid tiny tk (per-grid-step overhead) unless nothing else fits.
    for tk_floor in (min(_LANE, S), 1):
        for tq in tq_cands:
            for tk in tk_cands:
                if tk < tk_floor:
                    continue
                if _vmem_footprint(tq, tk, H, D, HD, b_in, b_cmp) <= budget:
                    return tq, tk
    return tq_cands[-1], tk_cands[-1]


def self_attention(qkv, key_padding_mask=None, causal=False, softmax_scale=None,
                   block_q=None, block_k=None, compute_dtype=None):
    """Pallas TPU implementation of SelfAttention.forward.

    qkv: (B, S, 3, H, D)
    key_padding_mask: optional bool (B, S); True = keep, False = mask out.
    compute_dtype: dtype for the MXU operands (default bf16 for f32 inputs).
    Returns: (B, S, H, D)
    """
    B, S, three, H, D = qkv.shape
    assert three == 3
    HD = H * D
    # TODO(synk): lane-dense layout requires H*D to be a multiple of 128 (true for
    # standard transformer widths); pad D in the caller otherwise.
    assert HD % _LANE == 0, f"H*D={HD} must be a multiple of 128"
    scale = softmax_scale if softmax_scale is not None else 1.0 / math.sqrt(D)

    if compute_dtype is None:
        # bf16 MXU operands run at full rate on all generations; statistics/acc stay f32.
        compute_dtype = jnp.bfloat16 if qkv.dtype == jnp.float32 else qkv.dtype
    b_in = np.dtype(qkv.dtype).itemsize
    b_cmp = np.dtype(compute_dtype).itemsize

    has_bias = key_padding_mask is not None

    vmem_limit = _vmem_limit_bytes()
    budget = int(vmem_limit * 0.8)        # headroom for compiler temporaries
    tq, tk = _pick_tiles(S, H, D, HD, b_in, b_cmp, budget, has_bias, block_q, block_k)
    assert S % tq == 0 and S % tk == 0, "block sizes must divide the sequence length"
    if has_bias:
        assert tk == S or tk % _LANE == 0, "key-padding bias KV tiles must be 128-aligned"

    # Free reshape: collapse the contiguous (3, H, D) trailing dims so q/k/v tiles
    # are gathered directly by the BlockSpec DMA (no HBM split/transpose copies).
    qkv_flat = qkv.reshape(B, S, 3 * HD)

    nq, nkv = S // tq, S // tk

    if causal:
        # Fully-masked KV steps map onto the last block this q tile actually needs,
        # so Pallas sees an unchanged block index and elides the HBM DMA.
        def kv_block(qi, ki):
            return jnp.minimum(ki, (qi * tq + tq - 1) // tk)
    else:
        def kv_block(qi, ki):
            return ki

    q_spec = pl.BlockSpec((1, tq, HD), lambda b, qi, ki: (b, qi, 0))
    k_spec = pl.BlockSpec((1, tk, HD), lambda b, qi, ki: (b, kv_block(qi, ki), 1))
    v_spec = pl.BlockSpec((1, tk, HD), lambda b, qi, ki: (b, kv_block(qi, ki), 2))
    out_spec = pl.BlockSpec((1, tq, HD), lambda b, qi, ki: (b, qi, 0))

    in_specs = [q_spec, k_spec, v_spec]
    operands = [qkv_flat, qkv_flat, qkv_flat]
    if has_bias:
        bias = jnp.where(key_padding_mask, 0.0, -10000.0).astype(jnp.float32)
        operands.append(bias.reshape(B, 1, S))
        in_specs.append(pl.BlockSpec((1, 1, tk), lambda b, qi, ki: (b, 0, kv_block(qi, ki))))

    kernel = functools.partial(
        _mha_kernel, scale=float(scale), causal=bool(causal), H=H, D=D, tq=tq, tk=tk,
        has_bias=has_bias, compute_dtype=compute_dtype)

    out_flat = pl.pallas_call(
        kernel,
        out_shape=jax.ShapeDtypeStruct((B, S, HD), qkv.dtype),
        grid_spec=pltpu.PrefetchScalarGridSpec(
            num_scalar_prefetch=0,
            grid=(B, nq, nkv),
            in_specs=in_specs,
            out_specs=out_spec,
            scratch_shapes=[
                pltpu.VMEM((H, tq, D), compute_dtype),   # pre-scaled, pre-cast q
                pltpu.VMEM((H, tq, D), jnp.float32),     # output accumulator
                pltpu.VMEM((tq, H), jnp.float32),        # running max m (no lane-pad waste)
                pltpu.VMEM((tq, H), jnp.float32),        # running denom l
            ],
        ),
        compiler_params=pltpu.CompilerParams(
            dimension_semantics=("parallel", "parallel", "arbitrary"),
            vmem_limit_bytes=vmem_limit,
        ),
    )(*operands)

    return out_flat.reshape(B, S, H, D)   # free reshape back to 'bthd'


def _reference(qkv, key_padding_mask=None, causal=False, softmax_scale=None):
    B, S, _, H, D = qkv.shape
    scale = softmax_scale if softmax_scale is not None else 1.0 / math.sqrt(D)
    q, k, v = qkv[:, :, 0], qkv[:, :, 1], qkv[:, :, 2]  # (B, S, H, D)
    scores = jnp.einsum('bthd,bshd->bhts', q, k * scale)
    if key_padding_mask is not None:
        pad = jnp.where(key_padding_mask, 0.0, -10000.0).astype(scores.dtype)
        scores = scores + pad[:, None, None, :]
    if causal:
        cm = jnp.triu(jnp.full((S, S), -10000.0, dtype=scores.dtype), 1)
        scores = scores + cm
    attn = jax.nn.softmax(scores, axis=-1)
    return jnp.einsum('bhts,bshd->bthd', attn, v)


if __name__ == "__main__":
    key = jax.random.PRNGKey(0)
    B, S, H, D = 2, 8, 4, 32
    k1, k2, k3 = jax.random.split(key, 3)

    # --- base shape: padding-mask path, exact (f32) compute → tight tolerance ---
    qkv = jax.random.normal(k1, (B, S, 3, H, D), dtype=jnp.float32)
    key_padding_mask = jnp.ones((B, S), dtype=bool).at[1, -2:].set(False)

    out = jax.block_until_ready(
        self_attention(qkv, key_padding_mask=key_padding_mask, compute_dtype=jnp.float32))
    ref = _reference(qkv, key_padding_mask=key_padding_mask)
    assert out.shape == (B, S, H, D)
    assert jnp.allclose(out, ref, atol=5e-3, rtol=5e-3)   # approx-reciprocal tolerance

    # --- default path (bf16 MXU operands) → looser tolerance ---
    out_bf = jax.block_until_ready(self_attention(qkv, key_padding_mask=key_padding_mask))
    assert jnp.allclose(out_bf, ref, atol=3e-2, rtol=3e-2)

    out_c = jax.block_until_ready(self_attention(qkv, causal=True))
    ref_c = _reference(qkv, causal=True)
    assert jnp.allclose(out_c, ref_c, atol=3e-2, rtol=3e-2)

    # --- multi-tile online softmax + causal KV skipping / DMA clamping (tiny tiles) ---
    S2 = 16
    qkv2 = jax.random.normal(k2, (B, S2, 3, H, D), dtype=jnp.float32)
    out2 = jax.block_until_ready(self_attention(qkv2, causal=True, block_q=8, block_k=8))
    ref2 = _reference(qkv2, causal=True)
    assert jnp.allclose(out2, ref2, atol=3e-2, rtol=3e-2)

    # --- multi-KV-tile path with key padding bias (128-aligned tiles) ---
    S3 = 256
    qkv3 = jax.random.normal(k3, (B, S3, 3, H, D), dtype=jnp.float32)
    mask3 = jnp.ones((B, S3), dtype=bool).at[0, -17:].set(False)
    out3 = jax.block_until_ready(
        self_attention(qkv3, key_padding_mask=mask3, block_q=128, block_k=128))
    ref3 = _reference(qkv3, key_padding_mask=mask3)
    assert jnp.allclose(out3, ref3, atol=3e-2, rtol=3e-2)

    print("KERNEL_OK")
</pallas_src>

<mosaic_0001>
module attributes {stable_mosaic.version = 11 : i64} {
  func.func @_mha_kernel(%arg0: i32, %arg1: i32, %arg2: i32, %arg3: memref<1x8x128xf32, #tpu.memory_space<vmem>>, %arg4: memref<1x8x128xf32, #tpu.memory_space<vmem>>, %arg5: memref<1x8x128xf32, #tpu.memory_space<vmem>>, %arg6: memref<1x1x8xf32, #tpu.memory_space<vmem>>, %arg7: memref<1x8x128xf32, #tpu.memory_space<vmem>>, %arg8: memref<4x8x32xf32, #tpu.memory_space<vmem>>, %arg9: memref<4x8x32xf32, #tpu.memory_space<vmem>>, %arg10: memref<8x4xf32, #tpu.memory_space<vmem>>, %arg11: memref<8x4xf32, #tpu.memory_space<vmem>>) attributes {dimension_semantics = [#tpu.dimension_semantics<parallel>, #tpu.dimension_semantics<parallel>, #tpu.dimension_semantics<arbitrary>], iteration_bounds = array<i64: 2, 1, 1>, scalar_prefetch = 0 : i64, scratch_operands = 4 : i64, tpu.core_type = #tpu.core_type<tc>, window_params = [{transform_indices = @transform_0, window_bounds = array<i64: 1, 8, 128>}, {transform_indices = @transform_1, window_bounds = array<i64: 1, 8, 128>}, {transform_indices = @transform_2, window_bounds = array<i64: 1, 8, 128>}, {transform_indices = @transform_3, window_bounds = array<i64: 1, 1, 8>}, {transform_indices = @transform_4, window_bounds = array<i64: 1, 8, 128>}]} {
    %c0_i32 = arith.constant 0 : i32
    %0 = arith.cmpi eq, %arg2, %c0_i32 : i32
    %1 = arith.extui %0 : i1 to i32
    %c0_i32_0 = arith.constant 0 : i32
    %2 = arith.cmpi ne, %1, %c0_i32_0 : i32
    scf.if %2 {
      %cst_106 = arith.constant 0xFF800000 : f32
      %144 = vector.broadcast %cst_106 : f32 to vector<8x4xf32>
      %c0_107 = arith.constant 0 : index
      %c0_108 = arith.constant 0 : index
      %145 = vector.load %arg10[%c0_107, %c0_108] : memref<8x4xf32, #tpu.memory_space<vmem>>, vector<8x4xf32>
      tpu.vector_store %arg10[%c0_107, %c0_108], %144 {strides = array<i32>} : memref<8x4xf32, #tpu.memory_space<vmem>>, vector<8x4xf32>,
      %cst_109 = arith.constant 0.000000e+00 : f32
      %146 = vector.broadcast %cst_109 : f32 to vector<8x4xf32>
      %c0_110 = arith.constant 0 : index
      %c0_111 = arith.constant 0 : index
      %147 = vector.load %arg11[%c0_110, %c0_111] : memref<8x4xf32, #tpu.memory_space<vmem>>, vector<8x4xf32>
      tpu.vector_store %arg11[%c0_110, %c0_111], %146 {strides = array<i32>} : memref<8x4xf32, #tpu.memory_space<vmem>>, vector<8x4xf32>,
      %cst_112 = arith.constant 0.000000e+00 : f32
      %148 = vector.broadcast %cst_112 : f32 to vector<4x8x32xf32>
      %c0_113 = arith.constant 0 : index
      %c0_114 = arith.constant 0 : index
      %c0_115 = arith.constant 0 : index
      %149 = vector.load %arg9[%c0_113, %c0_114, %c0_115] : memref<4x8x32xf32, #tpu.memory_space<vmem>>, vector<4x8x32xf32>
      tpu.vector_store %arg9[%c0_113, %c0_114, %c0_115], %148 {strides = array<i32>} : memref<4x8x32xf32, #tpu.memory_space<vmem>>, vector<4x8x32xf32>,
      %c0_116 = arith.constant 0 : index
      %c0_117 = arith.constant 0 : index
      %c0_118 = arith.constant 0 : index
      %150 = vector.load %arg3[%c0_116, %c0_117, %c0_118] : memref<1x8x128xf32, #tpu.memory_space<vmem>>, vector<1x8x32xf32>
      %151 = vector.shape_cast %150 : vector<1x8x32xf32> to vector<8x32xf32>
      %cst_119 = arith.constant 0.176776692 : f32
      %152 = vector.broadcast %cst_119 : f32 to vector<8x32xf32>
      %153 = arith.mulf %151, %152 : vector<8x32xf32>
      %c0_120 = arith.constant 0 : index
      %c0_121 = arith.constant 0 : index
      %c0_122 = arith.constant 0 : index
      %154 = vector.load %arg8[%c0_120, %c0_121, %c0_122] : memref<4x8x32xf32, #tpu.memory_space<vmem>>, vector<1x8x32xf32>
      %155 = vector.shape_cast %154 : vector<1x8x32xf32> to vector<8x32xf32>
      %156 = vector.shape_cast %153 : vector<8x32xf32> to vector<1x8x32xf32>
      tpu.vector_store %arg8[%c0_120, %c0_121, %c0_122], %156 {strides = array<i32>} : memref<4x8x32xf32, #tpu.memory_space<vmem>>, vector<1x8x32xf32>,
      %c0_123 = arith.constant 0 : index
      %c0_124 = arith.constant 0 : index
      %c32_125 = arith.constant 32 : index
      %157 = vector.load %arg3[%c0_123, %c0_124, %c32_125] : memref<1x8x128xf32, #tpu.memory_space<vmem>>, vector<1x8x32xf32>
      %158 = vector.shape_cast %157 : vector<1x8x32xf32> to vector<8x32xf32>
      %cst_126 = arith.constant 0.176776692 : f32
      %159 = vector.broadcast %cst_126 : f32 to vector<8x32xf32>
      %160 = arith.mulf %158, %159 : vector<8x32xf32>
      %c1_127 = arith.constant 1 : index
      %c0_128 = arith.constant 0 : index
      %c0_129 = arith.constant 0 : index
      %161 = vector.load %arg8[%c1_127, %c0_128, %c0_129] : memref<4x8x32xf32, #tpu.memory_space<vmem>>, vector<1x8x32xf32>
      %162 = vector.shape_cast %161 : vector<1x8x32xf32> to vector<8x32xf32>
      %163 = vector.shape_cast %160 : vector<8x32xf32> to vector<1x8x32xf32>
      tpu.vector_store %arg8[%c1_127, %c0_128, %c0_129], %163 {strides = array<i32>} : memref<4x8x32xf32, #tpu.memory_space<vmem>>, vector<1x8x32xf32>,
      %c0_130 = arith.constant 0 : index
      %c0_131 = arith.constant 0 : index
      %c64_132 = arith.constant 64 : index
      %164 = vector.load %arg3[%c0_130, %c0_131, %c64_132] : memref<1x8x128xf32, #tpu.memory_space<vmem>>, vector<1x8x32xf32>
      %165 = vector.shape_cast %164 : vector<1x8x32xf32> to vector<8x32xf32>
      %cst_133 = arith.constant 0.176776692 : f32
      %166 = vector.broadcast %cst_133 : f32 to vector<8x32xf32>
      %167 = arith.mulf %165, %166 : vector<8x32xf32>
      %c2_134 = arith.constant 2 : index
      %c0_135 = arith.constant 0 : index
      %c0_136 = arith.constant 0 : index
      %168 = vector.load %arg8[%c2_134, %c0_135, %c0_136] : memref<4x8x32xf32, #tpu.memory_space<vmem>>, vector<1x8x32xf32>
      %169 = vector.shape_cast %168 : vector<1x8x32xf32> to vector<8x32xf32>
      %170 = vector.shape_cast %167 : vector<8x32xf32> to vector<1x8x32xf32>
      tpu.vector_store %arg8[%c2_134, %c0_135, %c0_136], %170 {strides = array<i32>} : memref<4x8x32xf32, #tpu.memory_space<vmem>>, vector<1x8x32xf32>,
      %c0_137 = arith.constant 0 : index
      %c0_138 = arith.constant 0 : index
      %c96_139 = arith.constant 96 : index
      %171 = vector.load %arg3[%c0_137, %c0_138, %c96_139] : memref<1x8x128xf32, #tpu.memory_space<vmem>>, vector<1x8x32xf32>
      %172 = vector.shape_cast %171 : vector<1x8x32xf32> to vector<8x32xf32>
      %cst_140 = arith.constant 0.176776692 : f32
      %173 = vector.broadcast %cst_140 : f32 to vector<8x32xf32>
      %174 = arith.mulf %172, %173 : vector<8x32xf32>
      %c3_141 = arith.constant 3 : index
      %c0_142 = arith.constant 0 : index
      %c0_143 = arith.constant 0 : index
      %175 = vector.load %arg8[%c3_141, %c0_142, %c0_143] : memref<4x8x32xf32, #tpu.memory_space<vmem>>, vector<1x8x32xf32>
      %176 = vector.shape_cast %175 : vector<1x8x32xf32> to vector<8x32xf32>
      %177 = vector.shape_cast %174 : vector<8x32xf32> to vector<1x8x32xf32>
      tpu.vector_store %arg8[%c3_141, %c0_142, %c0_143], %177 {strides = array<i32>} : memref<4x8x32xf32, #tpu.memory_space<vmem>>, vector<1x8x32xf32>,
    } else {
    }
    %c0 = arith.constant 0 : index
    %c0_1 = arith.constant 0 : index
    %c0_2 = arith.constant 0 : index
    %3 = vector.load %arg6[%c0, %c0_1, %c0_2] : memref<1x1x8xf32, #tpu.memory_space<vmem>>, vector<1x1x8xf32>
    %4 = vector.shape_cast %3 : vector<1x1x8xf32> to vector<1x8xf32>
    %c0_3 = arith.constant 0 : index
    %c0_4 = arith.constant 0 : index
    %c0_5 = arith.constant 0 : index
    %5 = vector.load %arg8[%c0_3, %c0_4, %c0_5] : memref<4x8x32xf32, #tpu.memory_space<vmem>>, vector<1x8x32xf32>
    %6 = vector.shape_cast %5 : vector<1x8x32xf32> to vector<8x32xf32>
    %c0_6 = arith.constant 0 : index
    %c0_7 = arith.constant 0 : index
    %c0_8 = arith.constant 0 : index
    %7 = vector.load %arg4[%c0_6, %c0_7, %c0_8] : memref<1x8x128xf32, #tpu.memory_space<vmem>>, vector<1x8x32xf32>
    %8 = vector.shape_cast %7 : vector<1x8x32xf32> to vector<8x32xf32>
    %c0_9 = arith.constant 0 : index
    %c0_10 = arith.constant 0 : index
    %c0_11 = arith.constant 0 : index
    %9 = vector.load %arg5[%c0_9, %c0_10, %c0_11] : memref<1x8x128xf32, #tpu.memory_space<vmem>>, vector<1x8x32xf32>
    %10 = vector.shape_cast %9 : vector<1x8x32xf32> to vector<8x32xf32>
    %cst = arith.constant dense<0.000000e+00> : vector<8x8xf32>
    %11 = tpu.matmul %6, %8, %cst {dimension_numbers = #tpu.dot_dimension_numbers<[1], [1], [0], [0], [0, 0, 1, 0], [], []>} : vector<8x32xf32>, vector<8x32xf32>, vector<8x8xf32> -> vector<8x8xf32>
    %12 = vector.broadcast %4 : vector<1x8xf32> to vector<8x8xf32>
    %13 = arith.addf %11, %12 : vector<8x8xf32>
    %c0_12 = arith.constant 0 : index
    %c0_13 = arith.constant 0 : index
    %14 = vector.load %arg10[%c0_12, %c0_13] : memref<8x4xf32, #tpu.memory_space<vmem>>, vector<8x1xf32>
    %cst_14 = arith.constant dense<0xFF800000> : vector<8xf32>
    %15 = vector.multi_reduction <maximumf>, %13, %cst_14 [1] : vector<8x8xf32> to vector<8xf32>
    %16 = vector.shape_cast %15 : vector<8xf32> to vector<8x1xf32>
    %17 = arith.maximumf %14, %16 : vector<8x1xf32>
    %18 = arith.subf %14, %17 : vector<8x1xf32>
    %19 = math.exp %18 : vector<8x1xf32>
    %20 = vector.broadcast %17 : vector<8x1xf32> to vector<8x8xf32>
    %21 = arith.subf %13, %20 : vector<8x8xf32>
    %22 = math.exp %21 : vector<8x8xf32>
    %c0_15 = arith.constant 0 : index
    %c0_16 = arith.constant 0 : index
    %23 = vector.load %arg11[%c0_15, %c0_16] : memref<8x4xf32, #tpu.memory_space<vmem>>, vector<8x1xf32>
    %24 = arith.mulf %19, %23 : vector<8x1xf32>
    %cst_17 = arith.constant dense<0.000000e+00> : vector<8xf32>
    %25 = vector.multi_reduction <add>, %22, %cst_17 [1] : vector<8x8xf32> to vector<8xf32>
    %26 = vector.shape_cast %25 : vector<8xf32> to vector<8x1xf32>
    %27 = arith.addf %24, %26 : vector<8x1xf32>
    %c0_18 = arith.constant 0 : index
    %c0_19 = arith.constant 0 : index
    %28 = vector.load %arg11[%c0_18, %c0_19] : memref<8x4xf32, #tpu.memory_space<vmem>>, vector<8x1xf32>
    tpu.vector_store %arg11[%c0_18, %c0_19], %27 {strides = array<i32>} : memref<8x4xf32, #tpu.memory_space<vmem>>, vector<8x1xf32>,
    %c0_20 = arith.constant 0 : index
    %c0_21 = arith.constant 0 : index
    %c0_22 = arith.constant 0 : index
    %29 = vector.load %arg9[%c0_20, %c0_21, %c0_22] : memref<4x8x32xf32, #tpu.memory_space<vmem>>, vector<1x8x32xf32>
    %30 = vector.shape_cast %29 : vector<1x8x32xf32> to vector<8x32xf32>
    %31 = vector.broadcast %19 : vector<8x1xf32> to vector<8x32xf32>
    %32 = arith.mulf %31, %30 : vector<8x32xf32>
    %cst_23 = arith.constant dense<0.000000e+00> : vector<8x32xf32>
    %33 = tpu.matmul %22, %10, %cst_23 {dimension_numbers = #tpu.dot_dimension_numbers<[1], [0], [0], [1], [0, 0, 1, 1], [], []>} : vector<8x8xf32>, vector<8x32xf32>, vector<8x32xf32> -> vector<8x32xf32>
    %34 = arith.addf %32, %33 : vector<8x32xf32>
    %c0_24 = arith.constant 0 : index
    %c0_25 = arith.constant 0 : index
    %c0_26 = arith.constant 0 : index
    %35 = vector.load %arg9[%c0_24, %c0_25, %c0_26] : memref<4x8x32xf32, #tpu.memory_space<vmem>>, vector<1x8x32xf32>
    %36 = vector.shape_cast %35 : vector<1x8x32xf32> to vector<8x32xf32>
    %37 = vector.shape_cast %34 : vector<8x32xf32> to vector<1x8x32xf32>
    tpu.vector_store %arg9[%c0_24, %c0_25, %c0_26], %37 {strides = array<i32>} : memref<4x8x32xf32, #tpu.memory_space<vmem>>, vector<1x8x32xf32>,
    %c0_27 = arith.constant 0 : index
    %c0_28 = arith.constant 0 : index
    %38 = vector.load %arg10[%c0_27, %c0_28] : memref<8x4xf32, #tpu.memory_space<vmem>>, vector<8x1xf32>
    tpu.vector_store %arg10[%c0_27, %c0_28], %17 {strides = array<i32>} : memref<8x4xf32, #tpu.memory_space<vmem>>, vector<8x1xf32>,
    %c1 = arith.constant 1 : index
    %c0_29 = arith.constant 0 : index
    %c0_30 = arith.constant 0 : index
    %39 = vector.load %arg8[%c1, %c0_29, %c0_30] : memref<4x8x32xf32, #tpu.memory_space<vmem>>, vector<1x8x32xf32>
    %40 = vector.shape_cast %39 : vector<1x8x32xf32> to vector<8x32xf32>
    %c0_31 = arith.constant 0 : index
    %c0_32 = arith.constant 0 : index
    %c32 = arith.constant 32 : index
    %41 = vector.load %arg4[%c0_31, %c0_32, %c32] : memref<1x8x128xf32, #tpu.memory_space<vmem>>, vector<1x8x32xf32>
    %42 = vector.shape_cast %41 : vector<1x8x32xf32> to vector<8x32xf32>
    %c0_33 = arith.constant 0 : index
    %c0_34 = arith.constant 0 : index
    %c32_35 = arith.constant 32 : index
    %43 = vector.load %arg5[%c0_33, %c0_34, %c32_35] : memref<1x8x128xf32, #tpu.memory_space<vmem>>, vector<1x8x32xf32>
    %44 = vector.shape_cast %43 : vector<1x8x32xf32> to vector<8x32xf32>
    %cst_36 = arith.constant dense<0.000000e+00> : vector<8x8xf32>
    %45 = tpu.matmul %40, %42, %cst_36 {dimension_numbers = #tpu.dot_dimension_numbers<[1], [1], [0], [0], [0, 0, 1, 0], [], []>} : vector<8x32xf32>, vector<8x32xf32>, vector<8x8xf32> -> vector<8x8xf32>
    %46 = vector.broadcast %4 : vector<1x8xf32> to vector<8x8xf32>
    %47 = arith.addf %45, %46 : vector<8x8xf32>
    %c0_37 = arith.constant 0 : index
    %c1_38 = arith.constant 1 : index
    %48 = vector.load %arg10[%c0_37, %c1_38] : memref<8x4xf32, #tpu.memory_space<vmem>>, vector<8x1xf32>
    %cst_39 = arith.constant dense<0xFF800000> : vector<8xf32>
    %49 = vector.multi_reduction <maximumf>, %47, %cst_39 [1] : vector<8x8xf32> to vector<8xf32>
    %50 = vector.shape_cast %49 : vector<8xf32> to vector<8x1xf32>
    %51 = arith.maximumf %48, %50 : vector<8x1xf32>
    %52 = arith.subf %48, %51 : vector<8x1xf32>
    %53 = math.exp %52 : vector<8x1xf32>
    %54 = vector.broadcast %51 : vector<8x1xf32> to vector<8x8xf32>
    %55 = arith.subf %47, %54 : vector<8x8xf32>
    %56 = math.exp %55 : vector<8x8xf32>
    %c0_40 = arith.constant 0 : index
    %c1_41 = arith.constant 1 : index
    %57 = vector.load %arg11[%c0_40, %c1_41] : memref<8x4xf32, #tpu.memory_space<vmem>>, vector<8x1xf32>
    %58 = arith.mulf %53, %57 : vector<8x1xf32>
    %cst_42 = arith.constant dense<0.000000e+00> : vector<8xf32>
    %59 = vector.multi_reduction <add>, %56, %cst_42 [1] : vector<8x8xf32> to vector<8xf32>
    %60 = vector.shape_cast %59 : vector<8xf32> to vector<8x1xf32>
    %61 = arith.addf %58, %60 : vector<8x1xf32>
    %c0_43 = arith.constant 0 : index
    %c1_44 = arith.constant 1 : index
    %62 = vector.load %arg11[%c0_43, %c1_44] : memref<8x4xf32, #tpu.memory_space<vmem>>, vector<8x1xf32>
    tpu.vector_store %arg11[%c0_43, %c1_44], %61 {strides = array<i32>} : memref<8x4xf32, #tpu.memory_space<vmem>>, vector<8x1xf32>,
    %c1_45 = arith.constant 1 : index
    %c0_46 = arith.constant 0 : index
    %c0_47 = arith.constant 0 : index
    %63 = vector.load %arg9[%c1_45, %c0_46, %c0_47] : memref<4x8x32xf32, #tpu.memory_space<vmem>>, vector<1x8x32xf32>
    %64 = vector.shape_cast %63 : vector<1x8x32xf32> to vector<8x32xf32>
    %65 = vector.broadcast %53 : vector<8x1xf32> to vector<8x32xf32>
    %66 = arith.mulf %65, %64 : vector<8x32xf32>
    %cst_48 = arith.constant dense<0.000000e+00> : vector<8x32xf32>
    %67 = tpu.matmul %56, %44, %cst_48 {dimension_numbers = #tpu.dot_dimension_numbers<[1], [0], [0], [1], [0, 0, 1, 1], [], []>} : vector<8x8xf32>, vector<8x32xf32>, vector<8x32xf32> -> vector<8x32xf32>
    %68 = arith.addf %66, %67 : vector<8x32xf32>
    %c1_49 = arith.constant 1 : index
    %c0_50 = arith.constant 0 : index
    %c0_51 = arith.constant 0 : index
    %69 = vector.load %arg9[%c1_49, %c0_50, %c0_51] : memref<4x8x32xf32, #tpu.memory_space<vmem>>, vector<1x8x32xf32>
    %70 = vector.shape_cast %69 : vector<1x8x32xf32> to vector<8x32xf32>
    %71 = vector.shape_cast %68 : vector<8x32xf32> to vector<1x8x32xf32>
    tpu.vector_store %arg9[%c1_49, %c0_50, %c0_51], %71 {strides = array<i32>} : memref<4x8x32xf32, #tpu.memory_space<vmem>>, vector<1x8x32xf32>,
    %c0_52 = arith.constant 0 : index
    %c1_53 = arith.constant 1 : index
    %72 = vector.load %arg10[%c0_52, %c1_53] : memref<8x4xf32, #tpu.memory_space<vmem>>, vector<8x1xf32>
    tpu.vector_store %arg10[%c0_52, %c1_53], %51 {strides = array<i32>} : memref<8x4xf32, #tpu.memory_space<vmem>>, vector<8x1xf32>,
    %c2 = arith.constant 2 : index
    %c0_54 = arith.constant 0 : index
    %c0_55 = arith.constant 0 : index
    %73 = vector.load %arg8[%c2, %c0_54, %c0_55] : memref<4x8x32xf32, #tpu.memory_space<vmem>>, vector<1x8x32xf32>
    %74 = vector.shape_cast %73 : vector<1x8x32xf32> to vector<8x32xf32>
    %c0_56 = arith.constant 0 : index
    %c0_57 = arith.constant 0 : index
    %c64 = arith.constant 64 : index
    %75 = vector.load %arg4[%c0_56, %c0_57, %c64] : memref<1x8x128xf32, #tpu.memory_space<vmem>>, vector<1x8x32xf32>
    %76 = vector.shape_cast %75 : vector<1x8x32xf32> to vector<8x32xf32>
    %c0_58 = arith.constant 0 : index
    %c0_59 = arith.constant 0 : index
    %c64_60 = arith.constant 64 : index
    %77 = vector.load %arg5[%c0_58, %c0_59, %c64_60] : memref<1x8x128xf32, #tpu.memory_space<vmem>>, vector<1x8x32xf32>
    %78 = vector.shape_cast %77 : vector<1x8x32xf32> to vector<8x32xf32>
    %cst_61 = arith.constant dense<0.000000e+00> : vector<8x8xf32>
    %79 = tpu.matmul %74, %76, %cst_61 {dimension_numbers = #tpu.dot_dimension_numbers<[1], [1], [0], [0], [0, 0, 1, 0], [], []>} : vector<8x32xf32>, vector<8x32xf32>, vector<8x8xf32> -> vector<8x8xf32>
    %80 = vector.broadcast %4 : vector<1x8xf32> to vector<8x8xf32>
    %81 = arith.addf %79, %80 : vector<8x8xf32>
    %c0_62 = arith.constant 0 : index
    %c2_63 = arith.constant 2 : index
    %82 = vector.load %arg10[%c0_62, %c2_63] : memref<8x4xf32, #tpu.memory_space<vmem>>, vector<8x1xf32>
    %cst_64 = arith.constant dense<0xFF800000> : vector<8xf32>
    %83 = vector.multi_reduction <maximumf>, %81, %cst_64 [1] : vector<8x8xf32> to vector<8xf32>
    %84 = vector.shape_cast %83 : vector<8xf32> to vector<8x1xf32>
    %85 = arith.maximumf %82, %84 : vector<8x1xf32>
    %86 = arith.subf %82, %85 : vector<8x1xf32>
    %87 = math.exp %86 : vector<8x1xf32>
    %88 = vector.broadcast %85 : vector<8x1xf32> to vector<8x8xf32>
    %89 = arith.subf %81, %88 : vector<8x8xf32>
    %90 = math.exp %89 : vector<8x8xf32>
    %c0_65 = arith.constant 0 : index
    %c2_66 = arith.constant 2 : index
    %91 = vector.load %arg11[%c0_65, %c2_66] : memref<8x4xf32, #tpu.memory_space<vmem>>, vector<8x1xf32>
    %92 = arith.mulf %87, %91 : vector<8x1xf32>
    %cst_67 = arith.constant dense<0.000000e+00> : vector<8xf32>
    %93 = vector.multi_reduction <add>, %90, %cst_67 [1] : vector<8x8xf32> to vector<8xf32>
    %94 = vector.shape_cast %93 : vector<8xf32> to vector<8x1xf32>
    %95 = arith.addf %92, %94 : vector<8x1xf32>
    %c0_68 = arith.constant 0 : index
    %c2_69 = arith.constant 2 : index
    %96 = vector.load %arg11[%c0_68, %c2_69] : memref<8x4xf32, #tpu.memory_space<vmem>>, vector<8x1xf32>
    tpu.vector_store %arg11[%c0_68, %c2_69], %95 {strides = array<i32>} : memref<8x4xf32, #tpu.memory_space<vmem>>, vector<8x1xf32>,
    %c2_70 = arith.constant 2 : index
    %c0_71 = arith.constant 0 : index
    %c0_72 = arith.constant 0 : index
    %97 = vector.load %arg9[%c2_70, %c0_71, %c0_72] : memref<4x8x32xf32, #tpu.memory_space<vmem>>, vector<1x8x32xf32>
    %98 = vector.shape_cast %97 : vector<1x8x32xf32> to vector<8x32xf32>
    %99 = vector.broadcast %87 : vector<8x1xf32> to vector<8x32xf32>
    %100 = arith.mulf %99, %98 : vector<8x32xf32>
    %cst_73 = arith.constant dense<0.000000e+00> : vector<8x32xf32>
    %101 = tpu.matmul %90, %78, %cst_73 {dimension_numbers = #tpu.dot_dimension_numbers<[1], [0], [0], [1], [0, 0, 1, 1], [], []>} : vector<8x8xf32>, vector<8x32xf32>, vector<8x32xf32> -> vector<8x32xf32>
    %102 = arith.addf %100, %101 : vector<8x32xf32>
    %c2_74 = arith.constant 2 : index
    %c0_75 = arith.constant 0 : index
    %c0_76 = arith.constant 0 : index
    %103 = vector.load %arg9[%c2_74, %c0_75, %c0_76] : memref<4x8x32xf32, #tpu.memory_space<vmem>>, vector<1x8x32xf32>
    %104 = vector.shape_cast %103 : vector<1x8x32xf32> to vector<8x32xf32>
    %105 = vector.shape_cast %102 : vector<8x32xf32> to vector<1x8x32xf32>
    tpu.vector_store %arg9[%c2_74, %c0_75, %c0_76], %105 {strides = array<i32>} : memref<4x8x32xf32, #tpu.memory_space<vmem>>, vector<1x8x32xf32>,
    %c0_77 = arith.constant 0 : index
    %c2_78 = arith.constant 2 : index
    %106 = vector.load %arg10[%c0_77, %c2_78] : memref<8x4xf32, #tpu.memory_space<vmem>>, vector<8x1xf32>
    tpu.vector_store %arg10[%c0_77, %c2_78], %85 {strides = array<i32>} : memref<8x4xf32, #tpu.memory_space<vmem>>, vector<8x1xf32>,
    %c3 = arith.constant 3 : index
    %c0_79 = arith.constant 0 : index
    %c0_80 = arith.constant 0 : index
    %107 = vector.load %arg8[%c3, %c0_79, %c0_80] : memref<4x8x32xf32, #tpu.memory_space<vmem>>, vector<1x8x32xf32>
    %108 = vector.shape_cast %107 : vector<1x8x32xf32> to vector<8x32xf32>
    %c0_81 = arith.constant 0 : index
    %c0_82 = arith.constant 0 : index
    %c96 = arith.constant 96 : index
    %109 = vector.load %arg4[%c0_81, %c0_82, %c96] : memref<1x8x128xf32, #tpu.memory_space<vmem>>, vector<1x8x32xf32>
    %110 = vector.shape_cast %109 : vector<1x8x32xf32> to vector<8x32xf32>
    %c0_83 = arith.constant 0 : index
    %c0_84 = arith.constant 0 : index
    %c96_85 = arith.constant 96 : index
    %111 = vector.load %arg5[%c0_83, %c0_84, %c96_85] : memref<1x8x128xf32, #tpu.memory_space<vmem>>, vector<1x8x32xf32>
    %112 = vector.shape_cast %111 : vector<1x8x32xf32> to vector<8x32xf32>
    %cst_86 = arith.constant dense<0.000000e+00> : vector<8x8xf32>
    %113 = tpu.matmul %108, %110, %cst_86 {dimension_numbers = #tpu.dot_dimension_numbers<[1], [1], [0], [0], [0, 0, 1, 0], [], []>} : vector<8x32xf32>, vector<8x32xf32>, vector<8x8xf32> -> vector<8x8xf32>
    %114 = vector.broadcast %4 : vector<1x8xf32> to vector<8x8xf32>
    %115 = arith.addf %113, %114 : vector<8x8xf32>
    %c0_87 = arith.constant 0 : index
    %c3_88 = arith.constant 3 : index
    %116 = vector.load %arg10[%c0_87, %c3_88] : memref<8x4xf32, #tpu.memory_space<vmem>>, vector<8x1xf32>
    %cst_89 = arith.constant dense<0xFF800000> : vector<8xf32>
    %117 = vector.multi_reduction <maximumf>, %115, %cst_89 [1] : vector<8x8xf32> to vector<8xf32>
    %118 = vector.shape_cast %117 : vector<8xf32> to vector<8x1xf32>
    %119 = arith.maximumf %116, %118 : vector<8x1xf32>
    %120 = arith.subf %116, %119 : vector<8x1xf32>
    %121 = math.exp %120 : vector<8x1xf32>
    %122 = vector.broadcast %119 : vector<8x1xf32> to vector<8x8xf32>
    %123 = arith.subf %115, %122 : vector<8x8xf32>
    %124 = math.exp %123 : vector<8x8xf32>
    %c0_90 = arith.constant 0 : index
    %c3_91 = arith.constant 3 : index
    %125 = vector.load %arg11[%c0_90, %c3_91] : memref<8x4xf32, #tpu.memory_space<vmem>>, vector<8x1xf32>
    %126 = arith.mulf %121, %125 : vector<8x1xf32>
    %cst_92 = arith.constant dense<0.000000e+00> : vector<8xf32>
    %127 = vector.multi_reduction <add>, %124, %cst_92 [1] : vector<8x8xf32> to vector<8xf32>
    %128 = vector.shape_cast %127 : vector<8xf32> to vector<8x1xf32>
    %129 = arith.addf %126, %128 : vector<8x1xf32>
    %c0_93 = arith.constant 0 : index
    %c3_94 = arith.constant 3 : index
    %130 = vector.load %arg11[%c0_93, %c3_94] : memref<8x4xf32, #tpu.memory_space<vmem>>, vector<8x1xf32>
    tpu.vector_store %arg11[%c0_93, %c3_94], %129 {strides = array<i32>} : memref<8x4xf32, #tpu.memory_space<vmem>>, vector<8x1xf32>,
    %c3_95 = arith.constant 3 : index
    %c0_96 = arith.constant 0 : index
    %c0_97 = arith.constant 0 : index
    %131 = vector.load %arg9[%c3_95, %c0_96, %c0_97] : memref<4x8x32xf32, #tpu.memory_space<vmem>>, vector<1x8x32xf32>
    %132 = vector.shape_cast %131 : vector<1x8x32xf32> to vector<8x32xf32>
    %133 = vector.broadcast %121 : vector<8x1xf32> to vector<8x32xf32>
    %134 = arith.mulf %133, %132 : vector<8x32xf32>
    %cst_98 = arith.constant dense<0.000000e+00> : vector<8x32xf32>
    %135 = tpu.matmul %124, %112, %cst_98 {dimension_numbers = #tpu.dot_dimension_numbers<[1], [0], [0], [1], [0, 0, 1, 1], [], []>} : vector<8x8xf32>, vector<8x32xf32>, vector<8x32xf32> -> vector<8x32xf32>
    %136 = arith.addf %134, %135 : vector<8x32xf32>
    %c3_99 = arith.constant 3 : index
    %c0_100 = arith.constant 0 : index
    %c0_101 = arith.constant 0 : index
    %137 = vector.load %arg9[%c3_99, %c0_100, %c0_101] : memref<4x8x32xf32, #tpu.memory_space<vmem>>, vector<1x8x32xf32>
    %138 = vector.shape_cast %137 : vector<1x8x32xf32> to vector<8x32xf32>
    %139 = vector.shape_cast %136 : vector<8x32xf32> to vector<1x8x32xf32>
    tpu.vector_store %arg9[%c3_99, %c0_100, %c0_101], %139 {strides = array<i32>} : memref<4x8x32xf32, #tpu.memory_space<vmem>>, vector<1x8x32xf32>,
    %c0_102 = arith.constant 0 : index
    %c3_103 = arith.constant 3 : index
    %140 = vector.load %arg10[%c0_102, %c3_103] : memref<8x4xf32, #tpu.memory_space<vmem>>, vector<8x1xf32>
    tpu.vector_store %arg10[%c0_102, %c3_103], %119 {strides = array<i32>} : memref<8x4xf32, #tpu.memory_space<vmem>>, vector<8x1xf32>,
    %c0_i32_104 = arith.constant 0 : i32
    %141 = arith.cmpi eq, %arg2, %c0_i32_104 : i32
    %142 = arith.extui %141 : i1 to i32
    %c0_i32_105 = arith.constant 0 : i32
    %143 = arith.cmpi ne, %142, %c0_i32_105 : i32
    scf.if %143 {
      %c0_106 = arith.constant 0 : index
      %c0_107 = arith.constant 0 : index
      %144 = vector.load %arg11[%c0_106, %c0_107] : memref<8x4xf32, #tpu.memory_space<vmem>>, vector<8x1xf32>
      %145 = tpu.reciprocal %144 {approx = true} : vector<8x1xf32> -> vector<8x1xf32>
      %c0_108 = arith.constant 0 : index
      %c0_109 = arith.constant 0 : index
      %c0_110 = arith.constant 0 : index
      %146 = vector.load %arg9[%c0_108, %c0_109, %c0_110] : memref<4x8x32xf32, #tpu.memory_space<vmem>>, vector<1x8x32xf32>
      %147 = vector.shape_cast %146 : vector<1x8x32xf32> to vector<8x32xf32>
      %148 = vector.broadcast %145 : vector<8x1xf32> to vector<8x32xf32>
      %149 = arith.mulf %147, %148 : vector<8x32xf32>
      %c0_111 = arith.constant 0 : index
      %c0_112 = arith.constant 0 : index
      %c0_113 = arith.constant 0 : index
      %150 = vector.load %arg7[%c0_111, %c0_112, %c0_113] : memref<1x8x128xf32, #tpu.memory_space<vmem>>, vector<1x8x32xf32>
      %151 = vector.shape_cast %150 : vector<1x8x32xf32> to vector<8x32xf32>
      %152 = vector.shape_cast %149 : vector<8x32xf32> to vector<1x8x32xf32>
      tpu.vector_store %arg7[%c0_111, %c0_112, %c0_113], %152 {strides = array<i32>} : memref<1x8x128xf32, #tpu.memory_space<vmem>>, vector<1x8x32xf32>,
      %c0_114 = arith.constant 0 : index
      %c1_115 = arith.constant 1 : index
      %153 = vector.load %arg11[%c0_114, %c1_115] : memref<8x4xf32, #tpu.memory_space<vmem>>, vector<8x1xf32>
      %154 = tpu.reciprocal %153 {approx = true} : vector<8x1xf32> -> vector<8x1xf32>
      %c1_116 = arith.constant 1 : index
      %c0_117 = arith.constant 0 : index
      %c0_118 = arith.constant 0 : index
      %155 = vector.load %arg9[%c1_116, %c0_117, %c0_118] : memref<4x8x32xf32, #tpu.memory_space<vmem>>, vector<1x8x32xf32>
      %156 = vector.shape_cast %155 : vector<1x8x32xf32> to vector<8x32xf32>
      %157 = vector.broadcast %154 : vector<8x1xf32> to vector<8x32xf32>
      %158 = arith.mulf %156, %157 : vector<8x32xf32>
      %c0_119 = arith.constant 0 : index
      %c0_120 = arith.constant 0 : index
      %c32_121 = arith.constant 32 : index
      %159 = vector.load %arg7[%c0_119, %c0_120, %c32_121] : memref<1x8x128xf32, #tpu.memory_space<vmem>>, vector<1x8x32xf32>
      %160 = vector.shape_cast %159 : vector<1x8x32xf32> to vector<8x32xf32>
      %161 = vector.shape_cast %158 : vector<8x32xf32> to vector<1x8x32xf32>
      tpu.vector_store %arg7[%c0_119, %c0_120, %c32_121], %161 {strides = array<i32>} : memref<1x8x128xf32, #tpu.memory_space<vmem>>, vector<1x8x32xf32>,
      %c0_122 = arith.constant 0 : index
      %c2_123 = arith.constant 2 : index
      %162 = vector.load %arg11[%c0_122, %c2_123] : memref<8x4xf32, #tpu.memory_space<vmem>>, vector<8x1xf32>
      %163 = tpu.reciprocal %162 {approx = true} : vector<8x1xf32> -> vector<8x1xf32>
      %c2_124 = arith.constant 2 : index
      %c0_125 = arith.constant 0 : index
      %c0_126 = arith.constant 0 : index
      %164 = vector.load %arg9[%c2_124, %c0_125, %c0_126] : memref<4x8x32xf32, #tpu.memory_space<vmem>>, vector<1x8x32xf32>
      %165 = vector.shape_cast %164 : vector<1x8x32xf32> to vector<8x32xf32>
      %166 = vector.broadcast %163 : vector<8x1xf32> to vector<8x32xf32>
      %167 = arith.mulf %165, %166 : vector<8x32xf32>
      %c0_127 = arith.constant 0 : index
      %c0_128 = arith.constant 0 : index
      %c64_129 = arith.constant 64 : index
      %168 = vector.load %arg7[%c0_127, %c0_128, %c64_129] : memref<1x8x128xf32, #tpu.memory_space<vmem>>, vector<1x8x32xf32>
      %169 = vector.shape_cast %168 : vector<1x8x32xf32> to vector<8x32xf32>
      %170 = vector.shape_cast %167 : vector<8x32xf32> to vector<1x8x32xf32>
      tpu.vector_store %arg7[%c0_127, %c0_128, %c64_129], %170 {strides = array<i32>} : memref<1x8x128xf32, #tpu.memory_space<vmem>>, vector<1x8x32xf32>,
      %c0_130 = arith.constant 0 : index
      %c3_131 = arith.constant 3 : index
      %171 = vector.load %arg11[%c0_130, %c3_131] : memref<8x4xf32, #tpu.memory_space<vmem>>, vector<8x1xf32>
      %172 = tpu.reciprocal %171 {approx = true} : vector<8x1xf32> -> vector<8x1xf32>
      %c3_132 = arith.constant 3 : index
      %c0_133 = arith.constant 0 : index
      %c0_134 = arith.constant 0 : index
      %173 = vector.load %arg9[%c3_132, %c0_133, %c0_134] : memref<4x8x32xf32, #tpu.memory_space<vmem>>, vector<1x8x32xf32>
      %174 = vector.shape_cast %173 : vector<1x8x32xf32> to vector<8x32xf32>
      %175 = vector.broadcast %172 : vector<8x1xf32> to vector<8x32xf32>
      %176 = arith.mulf %174, %175 : vector<8x32xf32>
      %c0_135 = arith.constant 0 : index
      %c0_136 = arith.constant 0 : index
      %c96_137 = arith.constant 96 : index
      %177 = vector.load %arg7[%c0_135, %c0_136, %c96_137] : memref<1x8x128xf32, #tpu.memory_space<vmem>>, vector<1x8x32xf32>
      %178 = vector.shape_cast %177 : vector<1x8x32xf32> to vector<8x32xf32>
      %179 = vector.shape_cast %176 : vector<8x32xf32> to vector<1x8x32xf32>
      tpu.vector_store %arg7[%c0_135, %c0_136, %c96_137], %179 {strides = array<i32>} : memref<1x8x128xf32, #tpu.memory_space<vmem>>, vector<1x8x32xf32>,
    } else {
    }
    return
  }
  func.func @transform_0(%arg0: i32, %arg1: i32, %arg2: i32) -> (i32, i32, i32) {
    %c0_i32 = arith.constant 0 : i32
    %c0_i32_0 = arith.constant 0 : i32
    return %arg0, %arg1, %c0_i32 : i32, i32, i32
  }
  func.func @transform_1(%arg0: i32, %arg1: i32, %arg2: i32) -> (i32, i32, i32) {
    %c1_i32 = arith.constant 1 : i32
    %c0_i32 = arith.constant 0 : i32
    return %arg0, %arg2, %c1_i32 : i32, i32, i32
  }
  func.func @transform_2(%arg0: i32, %arg1: i32, %arg2: i32) -> (i32, i32, i32) {
    %c2_i32 = arith.constant 2 : i32
    %c0_i32 = arith.constant 0 : i32
    return %arg0, %arg2, %c2_i32 : i32, i32, i32
  }
  func.func @transform_3(%arg0: i32, %arg1: i32, %arg2: i32) -> (i32, i32, i32) {
    %c0_i32 = arith.constant 0 : i32
    %c0_i32_0 = arith.constant 0 : i32
    return %arg0, %c0_i32, %arg2 : i32, i32, i32
  }
  func.func @transform_4(%arg0: i32, %arg1: i32, %arg2: i32) -> (i32, i32, i32) {
    %c0_i32 = arith.constant 0 : i32
    %c0_i32_0 = arith.constant 0 : i32
    return %arg0, %arg1, %c0_i32 : i32, i32, i32
  }
}

</mosaic_0001>

<llo_original>
// kernel: tpu_custom_call.1
$region0: #{tpu_custom_call.1}
  #allocation0 [shape = 'u32[]', space=smem, size = 0x4, offset = 0x4, fixed_abs, tag = 'smem constant byte address 0x4 - core index']
  #allocation1 [shape = 'u32[144,128]{1,0:T(1,128)}', space=vmem, size = 0x12000, scoped, tag = 'internal scratch']
  #allocation2 [shape = 'f32[4,8,32]{2,1,0:T(8,128)}', space=vmem, size = 0x4000, scoped, tag = 'scratch operand']
  #allocation3 [shape = 'f32[4,8,32]{2,1,0:T(8,128)}', space=vmem, size = 0x4000, scoped, tag = 'scratch operand']
  #allocation4 [shape = 'f32[8,4]{1,0:T(8,128)}', space=vmem, size = 0x1000, scoped, tag = 'scratch operand']
  #allocation5 [shape = 'f32[8,4]{1,0:T(8,128)}', space=vmem, size = 0x1000, scoped, tag = 'scratch operand']
  %s0 = inlined_call_operand.hbm [shape: f32[2,8,384], index: 0, kind: input, shape index: {}]
  %s1 = inlined_call_operand.hbm [shape: f32[2,8,384], index: 1, kind: input, shape index: {}]
  %s2 = inlined_call_operand.hbm [shape: f32[2,8,384], index: 2, kind: input, shape index: {}]
  %s3 = inlined_call_operand.vmem [shape: f32[2,1,8], index: 3, kind: input, shape index: {}]
  %s4 = inlined_call_operand.hbm [shape: f32[2,8,128], index: 4, kind: output, shape index: {}]
  %s5 = sld [smem:[#allocation0]]
  $region69: #{tpu_custom_call.1} parent=0
    _
  %s7 = ssub.s32 1, %s5
  %s8 = scalar_select 0, %s7, %s5
  $region1: #{tpu_custom_call.1} parent=0
    #allocation6 [shape = 'u8[8192]{0}', space=vmem, size = 0x2000, scoped, tag = 'input window, operand 0']
    #allocation7 [shape = 's32[2]{0}', space=sflag, size = 0x8, scoped, tag = 'scoped memory for tpu_custom_call.1']
    #allocation8 [shape = 's32[2]{0}', space=sflag, size = 0x8, scoped, tag = 'scoped memory for tpu_custom_call.1']
    #allocation9 [shape = 'u8[8192]{0}', space=vmem, size = 0x2000, scoped, tag = 'input window, operand 1']
    #allocation10 [shape = 's32[2]{0}', space=sflag, size = 0x8, scoped, tag = 'scoped memory for tpu_custom_call.1']
    #allocation11 [shape = 'u8[8192]{0}', space=vmem, size = 0x2000, scoped, tag = 'input window, operand 2']
    #allocation12 [shape = 'u8[8192]{0}', space=vmem, size = 0x2000, scoped, tag = 'output window, operand 0']
    %9 = vsyncpa [#allocation7], 0
    %s10 = scalar_lea.sflag [#allocation7], 1
    %11 = vsyncpa %s10, 0
    %12 = vsyncpa [#allocation10], 0
    %s13 = scalar_lea.sflag [#allocation10], 1
    %14 = vsyncpa %s13, 0
    %15 = vsyncpa [#allocation8], 0
    %s16 = scalar_lea.sflag [#allocation8], 1
    %17 = vsyncpa %s16, 0
    loop: start=0, step=1, limit=4
    $region2: #{tpu_custom_call.1} parent=1 // loop_pre_header
      _
    $region3: #{tpu_custom_call.1} parent=1 // loop_header
      %s19 = sphi 0, %s23
      %p20 = scmp.ge.s32.totalorder %s19, 4
      %s26 = sphi 0, %s45
      %s27 = sphi 0, %s41
      %s28 = sphi 0, %s37
      %s29 = sphi 0, %s26
      %s30 = sphi 0, %s27
      %s31 = sphi 0, %s28
      %s32 = sphi 0, %s29
      %s33 = sphi 0, %s30
      %s34 = sphi 0, %s31
      %s50 = sphi 0, %s52
      %s53 = sphi 0, %s50
      %s54 = sphi 0, %s53
      %s70 = sphi 0, %s54
      %s78 = sphi 0, %s80
      %s81 = sphi 0, %s78
      %s82 = sphi 0, %s81
      %s98 = sphi 0, %s82
      %s106 = sphi 0, %s108
      %s109 = sphi 0, %s106
      %s110 = sphi 0, %s109
      %s126 = sphi 0, %s110
      %s134 = sphi 0, %s136
      %s137 = sphi 0, %s134
      %s138 = sphi 0, %s137
      %s154 = sphi 0, %s138
      %s162 = sphi 0, %s164
      %s165 = sphi 0, %s162
      %s166 = sphi 0, %s165
      %s182 = sphi 0, %s166
    $region4: #{tpu_custom_call.1} parent=1 // loop_header_branch
      %22 = sbr.rel (%p20) target = $region8
    $region5: #{tpu_custom_call.1} parent=1 // loop_body
      %s24 = ssub.s32 %s19, 1
      %s25 = ssub.s32 %s19, 2
      %s35 = sadd.s32 1, %s28
      %p36 = scmp.ge.s32.totalorder %s35, 1
      %s37 = scalar_select %p36, 0, %s35
      %s38 = sadd.s32 1, %s27
      %s39 = scalar_select %p36, %s38, %s27
      %p40 = scmp.ge.s32.totalorder %s39, 1
      %s41 = scalar_select %p40, 0, %s39
      %s42 = sadd.s32 1, %s26
      %s43 = scalar_select %p40, %s42, %s26
      %p44 = scmp.ge.s32.totalorder %s43, 2
      %s45 = scalar_select %p44, 0, %s43
      %s46 = ssub.s32 %s26, %s45
      %s47 = ssub.s32 %s27, %s41
      %s48 = sor.u32 %s46, %s47
      %p49 = scmp.eq.s32.totalorder %s48, 0
      %s51 = sadd.s32 %s50, 1
      %s52 = scalar_select %p49, %s50, %s51
      %p55 = pneg %p49
      %p56 = scmp.eq.s32.totalorder %s19, 1
      %p57 = por %p55, %p56
      %p58 = scmp.ne.s32.totalorder %s50, %s53
      %p59 = scmp.eq.s32.totalorder %s19, 0
      %p60 = por %p58, %p59
      %p61 = scmp.ne.s32.totalorder %s50, %s53
      %p62 = scmp.eq.s32.totalorder %s24, 1
      %p63 = por %p61, %p62
      %p64 = scmp.ne.s32.totalorder %s53, %s54
      %p65 = scmp.eq.s32.totalorder %s24, 0
      %p66 = por %p64, %p65
      %p67 = scmp.ne.s32.totalorder %s53, %s54
      %p68 = scmp.eq.s32.totalorder %s25, 1
      %p69 = por %p67, %p68
      %p71 = scmp.ne.s32.totalorder %s54, %s70
      %p72 = scmp.eq.s32.totalorder %s25, 0
      %p73 = por %p71, %p72
      %s74 = ssub.s32 %s26, %s45
      %s75 = ssub.s32 %s28, %s37
      %s76 = sor.u32 %s74, %s75
      %p77 = scmp.eq.s32.totalorder %s76, 0
      %s79 = sadd.s32 %s78, 1
      %s80 = scalar_select %p77, %s78, %s79
      %p83 = pneg %p77
      %p84 = scmp.eq.s32.totalorder %s19, 1
      %p85 = por %p83, %p84
      %p86 = scmp.ne.s32.totalorder %s78, %s81
      %p87 = scmp.eq.s32.totalorder %s19, 0
      %p88 = por %p86, %p87
      %p89 = scmp.ne.s32.totalorder %s78, %s81
      %p90 = scmp.eq.s32.totalorder %s24, 1
      %p91 = por %p89, %p90
      %p92 = scmp.ne.s32.totalorder %s81, %s82
      %p93 = scmp.eq.s32.totalorder %s24, 0
      %p94 = por %p92, %p93
      %p95 = scmp.ne.s32.totalorder %s81, %s82
      %p96 = scmp.eq.s32.totalorder %s25, 1
      %p97 = por %p95, %p96
      %p99 = scmp.ne.s32.totalorder %s82, %s98
      %p100 = scmp.eq.s32.totalorder %s25, 0
      %p101 = por %p99, %p100
      %s102 = ssub.s32 %s26, %s45
      %s103 = ssub.s32 %s28, %s37
      %s104 = sor.u32 %s102, %s103
      %p105 = scmp.eq.s32.totalorder %s104, 0
      %s107 = sadd.s32 %s106, 1
      %s108 = scalar_select %p105, %s106, %s107
      %p111 = pneg %p105
      %p112 = scmp.eq.s32.totalorder %s19, 1
      %p113 = por %p111, %p112
      %p114 = scmp.ne.s32.totalorder %s106, %s109
      %p115 = scmp.eq.s32.totalorder %s19, 0
      %p116 = por %p114, %p115
      %p117 = scmp.ne.s32.totalorder %s106, %s109
      %p118 = scmp.eq.s32.totalorder %s24, 1
      %p119 = por %p117, %p118
      %p120 = scmp.ne.s32.totalorder %s109, %s110
      %p121 = scmp.eq.s32.totalorder %s24, 0
      %p122 = por %p120, %p121
      %p123 = scmp.ne.s32.totalorder %s109, %s110
      %p124 = scmp.eq.s32.totalorder %s25, 1
      %p125 = por %p123, %p124
      %p127 = scmp.ne.s32.totalorder %s110, %s126
      %p128 = scmp.eq.s32.totalorder %s25, 0
      %p129 = por %p127, %p128
      %s130 = ssub.s32 %s26, %s45
      %s131 = ssub.s32 %s28, %s37
      %s132 = sor.u32 %s130, %s131
      %p133 = scmp.eq.s32.totalorder %s132, 0
      %s135 = sadd.s32 %s134, 1
      %s136 = scalar_select %p133, %s134, %s135
      %p139 = pneg %p133
      %p140 = scmp.eq.s32.totalorder %s19, 1
      %p141 = por %p139, %p140
      %p142 = scmp.ne.s32.totalorder %s134, %s137
      %p143 = scmp.eq.s32.totalorder %s19, 0
      %p144 = por %p142, %p143
      %p145 = scmp.ne.s32.totalorder %s134, %s137
      %p146 = scmp.eq.s32.totalorder %s24, 1
      %p147 = por %p145, %p146
      %p148 = scmp.ne.s32.totalorder %s137, %s138
      %p149 = scmp.eq.s32.totalorder %s24, 0
      %p150 = por %p148, %p149
      %p151 = scmp.ne.s32.totalorder %s137, %s138
      %p152 = scmp.eq.s32.totalorder %s25, 1
      %p153 = por %p151, %p152
      %p155 = scmp.ne.s32.totalorder %s138, %s154
      %p156 = scmp.eq.s32.totalorder %s25, 0
      %p157 = por %p155, %p156
      %s158 = ssub.s32 %s26, %s45
      %s159 = ssub.s32 %s27, %s41
      %s160 = sor.u32 %s158, %s159
      %p161 = scmp.eq.s32.totalorder %s160, 0
      %s163 = sadd.s32 %s162, 1
      %s164 = scalar_select %p161, %s162, %s163
      %p167 = pneg %p161
      %p168 = scmp.eq.s32.totalorder %s19, 1
      %p169 = por %p167, %p168
      %p170 = scmp.ne.s32.totalorder %s162, %s165
      %p171 = scmp.eq.s32.totalorder %s19, 0
      %p172 = por %p170, %p171
      %p173 = scmp.ne.s32.totalorder %s162, %s165
      %p174 = scmp.eq.s32.totalorder %s24, 1
      %p175 = por %p173, %p174
      %p176 = scmp.ne.s32.totalorder %s165, %s166
      %p177 = scmp.eq.s32.totalorder %s24, 0
      %p178 = por %p176, %p177
      %p179 = scmp.ne.s32.totalorder %s165, %s166
      %p180 = scmp.eq.s32.totalorder %s25, 1
      %p181 = por %p179, %p180
      %p183 = scmp.ne.s32.totalorder %s166, %s182
      %p184 = scmp.eq.s32.totalorder %s25, 0
      %p185 = por %p183, %p184
      %p186 = scmp.le.s32.totalorder 1, %s19
      %p187 = scmp.lt.s32.totalorder %s19, 3
      %p188 = pnand %p186, %p187
      %p189 = pneg %p188
      // Predicated region
      $region9: #{tpu_custom_call.1} parent=5 // pred_check
        _
      $region10: #{tpu_custom_call.1} parent=5 // pred_check_branch
        %191 = sbr.rel (%p188) target = $region12
      $region11: #{tpu_custom_call.1} parent=5 // pred_region
        %s192 = ssub.s32 %s19, 1
      $region12: #{tpu_custom_call.1} parent=5 // pred_fallthru
        _
      %p193 = scmp.lt.s32.totalorder %s19, 2
      // Predicated region
      $region13: #{tpu_custom_call.1} parent=5 // pred_check
        %p194 = pneg %p193
      $region14: #{tpu_custom_call.1} parent=5 // pred_check_branch
        %196 = sbr.rel (%p194) target = $region16
      $region15: #{tpu_custom_call.1} parent=5 // pred_region
        // Predicated region
        $region17: #{tpu_custom_call.1} parent=15 // pred_check
          %p197 = pneg %p60
        $region18: #{tpu_custom_call.1} parent=15 // pred_check_branch
          %199 = sbr.rel (%p197) target = $region20
        $region19: #{tpu_custom_call.1} parent=15 // pred_region
          %s200 = sand.u32 %s50, 1
          %s201 = scalar_lea.sflag [#allocation7], %s200
          %s202 = sand.u32 %s50, 1
          %s203 = smul.addr %s202, 8
          %s204 = scalar_lea.vmem [#allocation6], %s203
          %s206 = ssub.s32 128, 128
          %207 = vsyncadd %s201, %s206
          %s208 = smul.addr %s27, 3
          %s209 = smul.addr %s26, 3
          %s210 = sadd.s32 %s208, %s209
          %s211 = smul.addr %s210, 128
          %s212 = scalar_lea.hbm %s0, %s211
          %s214 = sshll.u32 %s204, 4
          %s215 = int_to_ptr.vmem [resolvable:$true] %s214
          %217 = dma.hbm_to_vmem [thread:$0]  %s212, 128, %s215, %s201
        $region20: #{tpu_custom_call.1} parent=15 // pred_fallthru
          _
        // Predicated region
        $region21: #{tpu_custom_call.1} parent=15 // pred_check
          %p218 = pneg %p88
        $region22: #{tpu_custom_call.1} parent=15 // pred_check_branch
          %220 = sbr.rel (%p218) target = $region24
        $region23: #{tpu_custom_call.1} parent=15 // pred_region
          %s221 = sand.u32 %s19, 1
          %s222 = scalar_lea.sflag [#allocation10], %s221
          %s223 = sand.u32 %s78, 1
          %s224 = smul.addr %s223, 8
          %s225 = scalar_lea.vmem [#allocation9], %s224
          %s227 = ssub.s32 128, 128
          %228 = vsyncadd %s222, %s227
          %s229 = smul.addr %s28, 3
          %s230 = sadd.s32 1, %s229
          %s231 = smul.addr %s26, 3
          %s232 = sadd.s32 %s230, %s231
          %s233 = smul.addr %s232, 128
          %s234 = scalar_lea.hbm %s1, %s233
          %s236 = sshll.u32 %s225, 4
          %s237 = int_to_ptr.vmem [resolvable:$true] %s236
          %239 = dma.hbm_to_vmem [thread:$0]  %s234, 128, %s237, %s222
        $region24: #{tpu_custom_call.1} parent=15 // pred_fallthru
          _
        // Predicated region
        $region25: #{tpu_custom_call.1} parent=15 // pred_check
          %p240 = pneg %p116
        $region26: #{tpu_custom_call.1} parent=15 // pred_check_branch
          %242 = sbr.rel (%p240) target = $region28
        $region27: #{tpu_custom_call.1} parent=15 // pred_region
          %s243 = sand.u32 %s19, 1
          %s244 = scalar_lea.sflag [#allocation10], %s243
          %s245 = sand.u32 %s106, 1
          %s246 = smul.addr %s245, 8
          %s247 = scalar_lea.vmem [#allocation11], %s246
          %s249 = ssub.s32 128, 128
          %250 = vsyncadd %s244, %s249
          %s251 = smul.addr %s28, 3
          %s252 = sadd.s32 2, %s251
          %s253 = smul.addr %s26, 3
          %s254 = sadd.s32 %s252, %s253
          %s255 = smul.addr %s254, 128
          %s256 = scalar_lea.hbm %s2, %s255
          %s258 = sshll.u32 %s247, 4
          %s259 = int_to_ptr.vmem [resolvable:$true] %s258
          %261 = dma.hbm_to_vmem [thread:$0]  %s256, 128, %s259, %s244
        $region28: #{tpu_custom_call.1} parent=15 // pred_fallthru
          _
        // Predicated region
        $region29: #{tpu_custom_call.1} parent=15 // pred_check
          %p262 = pneg %p144
        $region30: #{tpu_custom_call.1} parent=15 // pred_check_branch
          %264 = sbr.rel (%p262) target = $region32
        $region31: #{tpu_custom_call.1} parent=15 // pred_region
          %p265 = scmp.lt.s32.totalorder %s26, 1
          %s266 = scalar_select %p265, %s26, 1
          %p267 = scmp.lt.s32.totalorder %s28, 0
          %s268 = scalar_select %p267, %s28, 0
          %s269 = sadd.s32 %s268, %s266
          %s270 = scalar_lea.vmem %s3, %s269
        $region32: #{tpu_custom_call.1} parent=15 // pred_fallthru
          _
      $region16: #{tpu_custom_call.1} parent=5 // pred_fallthru
        _
      %p271 = scmp.le.s32.totalorder 1, %s19
      %p272 = scmp.lt.s32.totalorder %s19, 3
      %p273 = pnand %p271, %p272
      %p274 = pneg %p273
      // Predicated region
      $region33: #{tpu_custom_call.1} parent=5 // pred_check
        _
      $region34: #{tpu_custom_call.1} parent=5 // pred_check_branch
        %276 = sbr.rel (%p273) target = $region36
      $region35: #{tpu_custom_call.1} parent=5 // pred_region
        %s277 = ssub.s32 %s19, 1
        %s278 = sand.u32 %s53, 1
        %s279 = scalar_lea.sflag [#allocation7], %s278
        %s280 = sand.u32 %s53, 1
        %s281 = smul.addr %s280, 8
        %s282 = scalar_lea.vmem [#allocation6], %s281
        // Predicated region
        $region37: #{tpu_custom_call.1} parent=35 // pred_check
          %p283 = pneg %p66
        $region38: #{tpu_custom_call.1} parent=35 // pred_check_branch
          %285 = sbr.rel (%p283) target = $region40
        $region39: #{tpu_custom_call.1} parent=35 // pred_region
          %286 = dma.done %s279, 128
        $region40: #{tpu_custom_call.1} parent=35 // pred_fallthru
          _
        %s287 = sand.u32 %s24, 1
        %s288 = scalar_lea.sflag [#allocation10], %s287
        %s289 = sand.u32 %s81, 1
        %s290 = smul.addr %s289, 8
        %s291 = scalar_lea.vmem [#allocation9], %s290
        // Predicated region
        $region41: #{tpu_custom_call.1} parent=35 // pred_check
          %p292 = pneg %p94
        $region42: #{tpu_custom_call.1} parent=35 // pred_check_branch
          %294 = sbr.rel (%p292) target = $region44
        $region43: #{tpu_custom_call.1} parent=35 // pred_region
          %295 = dma.done %s288, 128
        $region44: #{tpu_custom_call.1} parent=35 // pred_fallthru
          _
        %s296 = sand.u32 %s24, 1
        %s297 = scalar_lea.sflag [#allocation10], %s296
        %s298 = sand.u32 %s109, 1
        %s299 = smul.addr %s298, 8
        %s300 = scalar_lea.vmem [#allocation11], %s299
        // Predicated region
        $region45: #{tpu_custom_call.1} parent=35 // pred_check
          %p301 = pneg %p122
        $region46: #{tpu_custom_call.1} parent=35 // pred_check_branch
          %303 = sbr.rel (%p301) target = $region48
        $region47: #{tpu_custom_call.1} parent=35 // pred_region
          %304 = dma.done %s297, 128
        $region48: #{tpu_custom_call.1} parent=35 // pred_fallthru
          _
        %s305 = sand.u32 %s53, 1
        %s306 = scalar_lea.sflag [#allocation7], %s305
        %s307 = sand.u32 %s53, 1
        %s308 = smul.addr %s307, 8
        %s309 = scalar_lea.vmem [#allocation6], %s308
        %p310 = pneg %p66
        %p311 = pneg %p63
        %s312 = sand.u32 %s24, 1
        %s313 = scalar_lea.sflag [#allocation10], %s312
        %s314 = sand.u32 %s81, 1
        %s315 = smul.addr %s314, 8
        %s316 = scalar_lea.vmem [#allocation9], %s315
        %p317 = pneg %p94
        %p318 = pneg %p91
        %s319 = sand.u32 %s24, 1
        %s320 = scalar_lea.sflag [#allocation10], %s319
        %s321 = sand.u32 %s109, 1
        %s322 = smul.addr %s321, 8
        %s323 = scalar_lea.vmem [#allocation11], %s322
        %p324 = pneg %p122
        %p325 = pneg %p119
        %p326 = scmp.lt.s32.totalorder %s29, 1
        %s327 = scalar_select %p326, %s29, 1
        %p328 = scmp.lt.s32.totalorder %s31, 0
        %s329 = scalar_select %p328, %s31, 0
        %s330 = sadd.s32 %s329, %s327
        %s331 = scalar_lea.vmem %s3, %s330
        %p332 = pneg %p150
        %p333 = pneg %p147
        %p334 = pneg %p178
        %p335 = pneg %p175
        %s336 = sand.u32 %s165, 1
        %s337 = scalar_lea.sflag [#allocation8], %s336
        %s338 = sand.u32 %s165, 1
        %s339 = smul.addr %s338, 8
        %s340 = scalar_lea.vmem [#allocation12], %s339
        %p341 = scmp.lt.s32.totalorder %s29, 1
        %s342 = scalar_select %p341, %s29, 1
        %p343 = scmp.lt.s32.totalorder %s31, 0
        %s344 = scalar_select %p343, %s31, 0
        %s345 = sadd.s32 %s344, %s342
        %s346 = scalar_lea.vmem %s3, %s345
        %p347 = scmp.eq.s32.totalorder %s31, 0
        // Predicated region
        $region49: #{tpu_custom_call.1} parent=35 // pred_check
          %p348 = pneg %p347
        $region50: #{tpu_custom_call.1} parent=35 // pred_check_branch
          %350 = sbr.rel (%p348) target = $region52
        $region51: #{tpu_custom_call.1} parent=35 // pred_region
          %vm351 = vcmask 31744
          %352 = vst.msk [vmem:[#allocation4] sm:$0xff] %vm351, -inf
          %353 = vst.msk [vmem:[#allocation5] sm:$0xff] %vm351, 0.0
          %vm354 = vcmask 261120
          %355 = vst.msk [vmem:[#allocation3] sm:$0xff] %vm354, 0.0
          %356 = vst.msk [vmem:[#allocation3 + $0x8] sm:$0xff] %vm354, 0.0
          %357 = vst.msk [vmem:[#allocation3 + $0x10] sm:$0xff] %vm354, 0.0
          %358 = vst.msk [vmem:[#allocation3 + $0x18] sm:$0xff] %vm354, 0.0
          %v359 = vld [vmem:[%s282] sm:$0xff]
          %v360 = vmul.f32 %v359, 0.17677669
          %361 = vst.msk [vmem:[#allocation2] sm:$0xff] %vm354, %v360
          %v362 = vld [vmem:[%s282] sm:$0xff]
          %v363 = vmul.f32 %v362, 0.17677669
          %365 = vrot.lane.b32.xlu0 %v363, 96
          %v366 = vpop.permute.xlu0 %365
          %s368 = scalar_lea.vmem [#allocation2], 8
          %369 = vst.msk [vmem:[%s368] sm:$0xff] %vm354, %v366
          %v370 = vld [vmem:[%s282] sm:$0xff]
          %v371 = vmul.f32 %v370, 0.17677669
          %373 = vrot.lane.b32.xlu0 %v371, 64
          %v374 = vpop.permute.xlu0 %373
          %s376 = scalar_lea.vmem [#allocation2], 16
          %377 = vst.msk [vmem:[%s376] sm:$0xff] %vm354, %v374
          %v378 = vld [vmem:[%s282] sm:$0xff]
          %v379 = vmul.f32 %v378, 0.17677669
          %381 = vrot.lane.b32.xlu0 %v379, 32
          %v382 = vpop.permute.xlu0 %381
          %s384 = scalar_lea.vmem [#allocation2], 24
          %385 = vst.msk [vmem:[%s384] sm:$0xff] %vm354, %v382
        $region52: #{tpu_custom_call.1} parent=35 // pred_fallthru
          _
        %v386 = vld [vmem:[%s346] sm:$0x1]
        %v387 = vld [vmem:[#allocation2] sm:$0xff]
        %v388 = vld [vmem:[%s291] sm:$0xff]
        %v389 = vld [vmem:[%s300] sm:$0xff]
        %v391 = vlaneseq
        %v392 = vshrl.u32 %v391, 7
        %v393 = vsub.s32 0, %v392
        %v394 = vrot.slane %v386, %v393
        %vm396 = vcmask 261120
        %v398 = vsel %vm396, %v387, 0
        %v401 = vsel %vm396, %v388, 0
        %403 = vmatprep.subr.mxu0 0.0
        %404 = vmatpush1.xpose.msra.mxu0 %v401
        %405 = vmatprep.subr.mxu0 0.0
        %406 = vmatpush1.xpose.msra.mxu0 0.0
        %407 = vmatprep.subr.mxu0 0.0
        %408 = vmatpush1.xpose.msra.mxu0 0.0
        %409 = vmatprep.subr.mxu0 0.0
        %410 = vmatpush1.xpose.msra.mxu0 0.0
        %411 = vmatprep.subr.mxu0 0.0
        %412 = vmatpush1.xpose.msra.mxu0 0.0
        %413 = vmatprep.subr.mxu0 0.0
        %414 = vmatpush1.xpose.msra.mxu0 0.0
        %415 = vmatprep.subr.mxu0 0.0
        %416 = vmatpush1.xpose.msra.mxu0 0.0
        %417 = vmatprep.subr.mxu0 0.0
        %418 = vmatpush1.xpose.msra.mxu0 0.0
        %419 = vmatprep.subr.mxu0 0.0
        %420 = vmatpush1.xpose.msra.mxu0 0.0
        %421 = vmatprep.subr.mxu0 0.0
        %422 = vmatpush1.xpose.msra.mxu0 0.0
        %423 = vmatprep.subr.mxu0 0.0
        %424 = vmatpush1.xpose.msra.mxu0 0.0
        %425 = vmatprep.subr.mxu0 0.0
        %426 = vmatpush1.xpose.msra.mxu0 0.0
        %427 = vmatprep.subr.mxu0 0.0
        %428 = vmatpush1.xpose.msra.mxu0 0.0
        %429 = vmatprep.subr.mxu0 0.0
        %430 = vmatpush1.xpose.msra.mxu0 0.0
        %431 = vmatprep.subr.mxu0 0.0
        %432 = vmatpush1.xpose.msra.mxu0 0.0
        %433 = vmatprep.subr.mxu0 0.0
        %434 = vmatpush1.xpose.msra.mxu0 0.0
        %435 = vmatprep.subr.mxu0 0.0
        %436 = vmatpush1.xpose.msra.mxu0 0.0
        %437 = vmatprep.subr.mxu0 0.0
        %438 = vmatpush1.xpose.msra.mxu0 0.0
        %439 = vmatprep.subr.mxu0 0.0
        %440 = vmatpush1.xpose.msra.mxu0 0.0
        %441 = vmatprep.subr.mxu0 0.0
        %442 = vmatpush1.xpose.msra.mxu0 0.0
        %443 = vmatprep.subr.mxu0 0.0
        %444 = vmatpush1.xpose.msra.mxu0 0.0
        %445 = vmatprep.subr.mxu0 0.0
        %446 = vmatpush1.xpose.msra.mxu0 0.0
        %447 = vmatprep.subr.mxu0 0.0
        %448 = vmatpush1.xpose.msra.mxu0 0.0
        %449 = vmatprep.subr.mxu0 0.0
        %450 = vmatpush1.xpose.msra.mxu0 0.0
        %451 = vmatprep.subr.mxu0 0.0
        %452 = vmatpush1.xpose.msra.mxu0 0.0
        %453 = vmatprep.subr.mxu0 0.0
        %454 = vmatpush1.xpose.msra.mxu0 0.0
        %455 = vmatprep.subr.mxu0 0.0
        %456 = vmatpush1.xpose.msra.mxu0 0.0
        %457 = vmatprep.subr.mxu0 0.0
        %458 = vmatpush1.xpose.msra.mxu0 0.0
        %459 = vmatprep.subr.mxu0 0.0
        %460 = vmatpush1.xpose.msra.mxu0 0.0
        %461 = vmatprep.subr.mxu0 0.0
        %462 = vmatpush1.xpose.msra.mxu0 0.0
        %463 = vmatprep.subr.mxu0 0.0
        %464 = vmatpush1.xpose.msra.mxu0 0.0
        %465 = vmatprep.subr.mxu0 0.0
        %466 = vmatpush1.xpose.msra.mxu0 0.0
        %467 = vmatprep.mubr.f32.mxu0 0.0
        %468 = vmatmul.mubr.f32.gmra.mrb[0].mxu0 %v398
        %v469 = vpop.f32.mrb[0].mxu0
        %v470 = vadd.f32 %v394, %v469
        %v471 = vpop.f32.mrb[0].mxu0
        %472 = vdwg.mxu0
        %v473 = vld [vmem:[#allocation4] sm:$0xff]
        %vm474 = vcmask 64512
        %v475 = vsel %vm474, %v470, -inf
        %476 = vmax.xlane.f32.xlu0 %v475
        %v477 = vpop.xlane.xlu0 %476
        %v478 = vmax.f32 %v473, %v477
        %v479 = vsub.f32 %v473, %v478
        %v480 = vmul.f32 %v479, 1.442695
        %v481 = vpow.pop %v480
        %483 = vset.pattern.permute.xlu0 0
        %484 = vperm.xlu0 %483, %v478
        %v485 = vpop.permute.xlu0 %484
        %v487 = vsub.f32 %v470, %v485
        %v488 = vmul.f32 %v487, 1.442695
        %v489 = vpow.pop %v488
        %v490 = vld [vmem:[#allocation5] sm:$0xff]
        %v491 = vmul.f32 %v481, %v490
        %v492 = vsel %vm474, %v489, 0.0
        %493 = vadd.xlane.f32.xlu0 %v492
        %v494 = vpop.xlane.xlu0 %493
        %v495 = vadd.f32 %v491, %v494
        %vm496 = vcmask 7168
        %497 = vst.msk [vmem:[#allocation5] sm:$0xff] %vm496, %v495
        %v498 = vld [vmem:[#allocation3] sm:$0xff]
        %500 = vset.pattern.permute.xlu0 0
        %501 = vperm.xlu0 %500, %v481
        %v502 = vpop.permute.xlu0 %501
        %v504 = vmul.f32 %v502, %v498
        %v506 = vsel %vm474, %v489, 0
        %508 = vmatprep.subr.mxu0 0.0
        %509 = vmatpush1.msra.mxu0 %v389
        %510 = vmatprep.subr.mxu0 0.0
        %511 = vmatpush1.msra.mxu0 0.0
        %512 = vmatprep.subr.mxu0 0.0
        %513 = vmatpush1.msra.mxu0 0.0
        %514 = vmatprep.subr.mxu0 0.0
        %515 = vmatpush1.msra.mxu0 0.0
        %516 = vmatprep.subr.mxu0 0.0
        %517 = vmatpush1.msra.mxu0 0.0
        %518 = vmatprep.subr.mxu0 0.0
        %519 = vmatpush1.msra.mxu0 0.0
        %520 = vmatprep.subr.mxu0 0.0
        %521 = vmatpush1.msra.mxu0 0.0
        %522 = vmatprep.subr.mxu0 0.0
        %523 = vmatpush1.msra.mxu0 0.0
        %524 = vmatprep.subr.mxu0 0.0
        %525 = vmatpush1.msra.mxu0 0.0
        %526 = vmatprep.subr.mxu0 0.0
        %527 = vmatpush1.msra.mxu0 0.0
        %528 = vmatprep.subr.mxu0 0.0
        %529 = vmatpush1.msra.mxu0 0.0
        %530 = vmatprep.subr.mxu0 0.0
        %531 = vmatpush1.msra.mxu0 0.0
        %532 = vmatprep.subr.mxu0 0.0
        %533 = vmatpush1.msra.mxu0 0.0
        %534 = vmatprep.subr.mxu0 0.0
        %535 = vmatpush1.msra.mxu0 0.0
        %536 = vmatprep.subr.mxu0 0.0
        %537 = vmatpush1.msra.mxu0 0.0
        %538 = vmatprep.subr.mxu0 0.0
        %539 = vmatpush1.msra.mxu0 0.0
        %540 = vmatprep.subr.mxu0 0.0
        %541 = vmatpush1.msra.mxu0 0.0
        %542 = vmatprep.subr.mxu0 0.0
        %543 = vmatpush1.msra.mxu0 0.0
        %544 = vmatprep.subr.mxu0 0.0
        %545 = vmatpush1.msra.mxu0 0.0
        %546 = vmatprep.subr.mxu0 0.0
        %547 = vmatpush1.msra.mxu0 0.0
        %548 = vmatprep.subr.mxu0 0.0
        %549 = vmatpush1.msra.mxu0 0.0
        %550 = vmatprep.subr.mxu0 0.0
        %551 = vmatpush1.msra.mxu0 0.0
        %552 = vmatprep.subr.mxu0 0.0
        %553 = vmatpush1.msra.mxu0 0.0
        %554 = vmatprep.subr.mxu0 0.0
        %555 = vmatpush1.msra.mxu0 0.0
        %556 = vmatprep.subr.mxu0 0.0
        %557 = vmatpush1.msra.mxu0 0.0
        %558 = vmatprep.subr.mxu0 0.0
        %559 = vmatpush1.msra.mxu0 0.0
        %560 = vmatprep.subr.mxu0 0.0
        %561 = vmatpush1.msra.mxu0 0.0
        %562 = vmatprep.subr.mxu0 0.0
        %563 = vmatpush1.msra.mxu0 0.0
        %564 = vmatprep.subr.mxu0 0.0
        %565 = vmatpush1.msra.mxu0 0.0
        %566 = vmatprep.subr.mxu0 0.0
        %567 = vmatpush1.msra.mxu0 0.0
        %568 = vmatprep.subr.mxu0 0.0
        %569 = vmatpush1.msra.mxu0 0.0
        %570 = vmatprep.subr.mxu0 0.0
        %571 = vmatpush1.msra.mxu0 0.0
        %572 = vmatprep.mubr.f32.mxu0 0.0
        %573 = vmatmul.mubr.f32.gmra.mrb[0].mxu0 %v506
        %v574 = vpop.f32.mrb[0].mxu0
        %v575 = vadd.f32 0.0, %v574
        %v576 = vpop.f32.mrb[0].mxu0
        %577 = vdwg.mxu0
        %v578 = vadd.f32 %v504, %v575
        %579 = vst.msk [vmem:[#allocation3] sm:$0xff] %vm396, %v578
        %580 = vst.msk [vmem:[#allocation4] sm:$0xff] %vm496, %v478
        %s581 = scalar_lea.vmem [#allocation2], 8
        %v582 = vld [vmem:[%s581] sm:$0xff]
        %v583 = vld [vmem:[%s291] sm:$0xff]
        %v584 = vld [vmem:[%s300] sm:$0xff]
        %586 = vrot.lane.b32.xlu0 %v583, 96
        %v587 = vpop.permute.xlu0 %586
        %v589 = vsel %vm396, %v582, 0
        %v591 = vsel %vm396, %v587, 0
        %593 = vmatprep.subr.mxu0 0.0
        %594 = vmatpush1.xpose.msra.mxu0 %v591
        %595 = vmatprep.subr.mxu0 0.0
        %596 = vmatpush1.xpose.msra.mxu0 0.0
        %597 = vmatprep.subr.mxu0 0.0
        %598 = vmatpush1.xpose.msra.mxu0 0.0
        %599 = vmatprep.subr.mxu0 0.0
        %600 = vmatpush1.xpose.msra.mxu0 0.0
        %601 = vmatprep.subr.mxu0 0.0
        %602 = vmatpush1.xpose.msra.mxu0 0.0
        %603 = vmatprep.subr.mxu0 0.0
        %604 = vmatpush1.xpose.msra.mxu0 0.0
        %605 = vmatprep.subr.mxu0 0.0
        %606 = vmatpush1.xpose.msra.mxu0 0.0
        %607 = vmatprep.subr.mxu0 0.0
        %608 = vmatpush1.xpose.msra.mxu0 0.0
        %609 = vmatprep.subr.mxu0 0.0
        %610 = vmatpush1.xpose.msra.mxu0 0.0
        %611 = vmatprep.subr.mxu0 0.0
        %612 = vmatpush1.xpose.msra.mxu0 0.0
        %613 = vmatprep.subr.mxu0 0.0
        %614 = vmatpush1.xpose.msra.mxu0 0.0
        %615 = vmatprep.subr.mxu0 0.0
        %616 = vmatpush1.xpose.msra.mxu0 0.0
        %617 = vmatprep.subr.mxu0 0.0
        %618 = vmatpush1.xpose.msra.mxu0 0.0
        %619 = vmatprep.subr.mxu0 0.0
        %620 = vmatpush1.xpose.msra.mxu0 0.0
        %621 = vmatprep.subr.mxu0 0.0
        %622 = vmatpush1.xpose.msra.mxu0 0.0
        %623 = vmatprep.subr.mxu0 0.0
        %624 = vmatpush1.xpose.msra.mxu0 0.0
        %625 = vmatprep.subr.mxu0 0.0
        %626 = vmatpush1.xpose.msra.mxu0 0.0
        %627 = vmatprep.subr.mxu0 0.0
        %628 = vmatpush1.xpose.msra.mxu0 0.0
        %629 = vmatprep.subr.mxu0 0.0
        %630 = vmatpush1.xpose.msra.mxu0 0.0
        %631 = vmatprep.subr.mxu0 0.0
        %632 = vmatpush1.xpose.msra.mxu0 0.0
        %633 = vmatprep.subr.mxu0 0.0
        %634 = vmatpush1.xpose.msra.mxu0 0.0
        %635 = vmatprep.subr.mxu0 0.0
        %636 = vmatpush1.xpose.msra.mxu0 0.0
        %637 = vmatprep.subr.mxu0 0.0
        %638 = vmatpush1.xpose.msra.mxu0 0.0
        %639 = vmatprep.subr.mxu0 0.0
        %640 = vmatpush1.xpose.msra.mxu0 0.0
        %641 = vmatprep.subr.mxu0 0.0
        %642 = vmatpush1.xpose.msra.mxu0 0.0
        %643 = vmatprep.subr.mxu0 0.0
        %644 = vmatpush1.xpose.msra.mxu0 0.0
        %645 = vmatprep.subr.mxu0 0.0
        %646 = vmatpush1.xpose.msra.mxu0 0.0
        %647 = vmatprep.subr.mxu0 0.0
        %648 = vmatpush1.xpose.msra.mxu0 0.0
        %649 = vmatprep.subr.mxu0 0.0
        %650 = vmatpush1.xpose.msra.mxu0 0.0
        %651 = vmatprep.subr.mxu0 0.0
        %652 = vmatpush1.xpose.msra.mxu0 0.0
        %653 = vmatprep.subr.mxu0 0.0
        %654 = vmatpush1.xpose.msra.mxu0 0.0
        %655 = vmatprep.subr.mxu0 0.0
        %656 = vmatpush1.xpose.msra.mxu0 0.0
        %657 = vmatprep.mubr.f32.mxu0 0.0
        %658 = vmatmul.mubr.f32.gmra.mrb[0].mxu0 %v589
        %v659 = vpop.f32.mrb[0].mxu0
        %v660 = vadd.f32 %v394, %v659
        %v661 = vpop.f32.mrb[0].mxu0
        %662 = vdwg.mxu0
        %v663 = vld [vmem:[#allocation4] sm:$0xff]
        %v664 = vsel %vm474, %v660, -inf
        %665 = vmax.xlane.f32.xlu0 %v664
        %v666 = vpop.xlane.xlu0 %665
        %v667 = vmax.f32 %v663, %v666
        %v668 = vsub.f32 %v663, %v667
        %v669 = vmul.f32 %v668, 1.442695
        %v670 = vpow.pop %v669
        %672 = vset.pattern.permute.xlu0 1
        %673 = vperm.xlu0 %672, %v667
        %v674 = vpop.permute.xlu0 %673
        %v676 = vsub.f32 %v660, %v674
        %v677 = vmul.f32 %v676, 1.442695
        %v678 = vpow.pop %v677
        %v679 = vld [vmem:[#allocation5] sm:$0xff]
        %v680 = vmul.f32 %v670, %v679
        %v681 = vsel %vm474, %v678, 0.0
        %682 = vadd.xlane.f32.xlu0 %v681
        %v683 = vpop.xlane.xlu0 %682
        %v684 = vadd.f32 %v680, %v683
        %vm685 = vcmask 15368
        %686 = vst.msk [vmem:[#allocation5] sm:$0xff] %vm685, %v684
        %s687 = scalar_lea.vmem [#allocation3], 8
        %v688 = vld [vmem:[%s687] sm:$0xff]
        %690 = vset.pattern.permute.xlu0 1
        %691 = vperm.xlu0 %690, %v670
        %v692 = vpop.permute.xlu0 %691
        %v694 = vmul.f32 %v692, %v688
        %696 = vrot.lane.b32.xlu0 %v584, 96
        %v697 = vpop.permute.xlu0 %696
        %v700 = vsel %vm474, %v678, 0
        %702 = vmatprep.subr.mxu0 0.0
        %703 = vmatpush1.msra.mxu0 %v697
        %704 = vmatprep.subr.mxu0 0.0
        %705 = vmatpush1.msra.mxu0 0.0
        %706 = vmatprep.subr.mxu0 0.0
        %707 = vmatpush1.msra.mxu0 0.0
        %708 = vmatprep.subr.mxu0 0.0
        %709 = vmatpush1.msra.mxu0 0.0
        %710 = vmatprep.subr.mxu0 0.0
        %711 = vmatpush1.msra.mxu0 0.0
        %712 = vmatprep.subr.mxu0 0.0
        %713 = vmatpush1.msra.mxu0 0.0
        %714 = vmatprep.subr.mxu0 0.0
        %715 = vmatpush1.msra.mxu0 0.0
        %716 = vmatprep.subr.mxu0 0.0
        %717 = vmatpush1.msra.mxu0 0.0
        %718 = vmatprep.subr.mxu0 0.0
        %719 = vmatpush1.msra.mxu0 0.0
        %720 = vmatprep.subr.mxu0 0.0
        %721 = vmatpush1.msra.mxu0 0.0
        %722 = vmatprep.subr.mxu0 0.0
        %723 = vmatpush1.msra.mxu0 0.0
        %724 = vmatprep.subr.mxu0 0.0
        %725 = vmatpush1.msra.mxu0 0.0
        %726 = vmatprep.subr.mxu0 0.0
        %727 = vmatpush1.msra.mxu0 0.0
        %728 = vmatprep.subr.mxu0 0.0
        %729 = vmatpush1.msra.mxu0 0.0
        %730 = vmatprep.subr.mxu0 0.0
        %731 = vmatpush1.msra.mxu0 0.0
        %732 = vmatprep.subr.mxu0 0.0
        %733 = vmatpush1.msra.mxu0 0.0
        %734 = vmatprep.subr.mxu0 0.0
        %735 = vmatpush1.msra.mxu0 0.0
        %736 = vmatprep.subr.mxu0 0.0
        %737 = vmatpush1.msra.mxu0 0.0
        %738 = vmatprep.subr.mxu0 0.0
        %739 = vmatpush1.msra.mxu0 0.0
        %740 = vmatprep.subr.mxu0 0.0
        %741 = vmatpush1.msra.mxu0 0.0
        %742 = vmatprep.subr.mxu0 0.0
        %743 = vmatpush1.msra.mxu0 0.0
        %744 = vmatprep.subr.mxu0 0.0
        %745 = vmatpush1.msra.mxu0 0.0
        %746 = vmatprep.subr.mxu0 0.0
        %747 = vmatpush1.msra.mxu0 0.0
        %748 = vmatprep.subr.mxu0 0.0
        %749 = vmatpush1.msra.mxu0 0.0
        %750 = vmatprep.subr.mxu0 0.0
        %751 = vmatpush1.msra.mxu0 0.0
        %752 = vmatprep.subr.mxu0 0.0
        %753 = vmatpush1.msra.mxu0 0.0
        %754 = vmatprep.subr.mxu0 0.0
        %755 = vmatpush1.msra.mxu0 0.0
        %756 = vmatprep.subr.mxu0 0.0
        %757 = vmatpush1.msra.mxu0 0.0
        %758 = vmatprep.subr.mxu0 0.0
        %759 = vmatpush1.msra.mxu0 0.0
        %760 = vmatprep.subr.mxu0 0.0
        %761 = vmatpush1.msra.mxu0 0.0
        %762 = vmatprep.subr.mxu0 0.0
        %763 = vmatpush1.msra.mxu0 0.0
        %764 = vmatprep.subr.mxu0 0.0
        %765 = vmatpush1.msra.mxu0 0.0
        %766 = vmatprep.mubr.f32.mxu0 0.0
        %767 = vmatmul.mubr.f32.gmra.mrb[0].mxu0 %v700
        %v768 = vpop.f32.mrb[0].mxu0
        %v769 = vadd.f32 0.0, %v768
        %v770 = vpop.f32.mrb[0].mxu0
        %771 = vdwg.mxu0
        %v772 = vadd.f32 %v694, %v769
        %773 = vst.msk [vmem:[%s687] sm:$0xff] %vm396, %v772
        %774 = vst.msk [vmem:[#allocation4] sm:$0xff] %vm685, %v667
        %s775 = scalar_lea.vmem [#allocation2], 16
        %v776 = vld [vmem:[%s775] sm:$0xff]
        %v777 = vld [vmem:[%s291] sm:$0xff]
        %v778 = vld [vmem:[%s300] sm:$0xff]
        %780 = vrot.lane.b32.xlu0 %v777, 64
        %v781 = vpop.permute.xlu0 %780
        %v783 = vsel %vm396, %v776, 0
        %v785 = vsel %vm396, %v781, 0
        %787 = vmatprep.subr.mxu0 0.0
        %788 = vmatpush1.xpose.msra.mxu0 %v785
        %789 = vmatprep.subr.mxu0 0.0
        %790 = vmatpush1.xpose.msra.mxu0 0.0
        %791 = vmatprep.subr.mxu0 0.0
        %792 = vmatpush1.xpose.msra.mxu0 0.0
        %793 = vmatprep.subr.mxu0 0.0
        %794 = vmatpush1.xpose.msra.mxu0 0.0
        %795 = vmatprep.subr.mxu0 0.0
        %796 = vmatpush1.xpose.msra.mxu0 0.0
        %797 = vmatprep.subr.mxu0 0.0
        %798 = vmatpush1.xpose.msra.mxu0 0.0
        %799 = vmatprep.subr.mxu0 0.0
        %800 = vmatpush1.xpose.msra.mxu0 0.0
        %801 = vmatprep.subr.mxu0 0.0
        %802 = vmatpush1.xpose.msra.mxu0 0.0
        %803 = vmatprep.subr.mxu0 0.0
        %804 = vmatpush1.xpose.msra.mxu0 0.0
        %805 = vmatprep.subr.mxu0 0.0
        %806 = vmatpush1.xpose.msra.mxu0 0.0
        %807 = vmatprep.subr.mxu0 0.0
        %808 = vmatpush1.xpose.msra.mxu0 0.0
        %809 = vmatprep.subr.mxu0 0.0
        %810 = vmatpush1.xpose.msra.mxu0 0.0
        %811 = vmatprep.subr.mxu0 0.0
        %812 = vmatpush1.xpose.msra.mxu0 0.0
        %813 = vmatprep.subr.mxu0 0.0
        %814 = vmatpush1.xpose.msra.mxu0 0.0
        %815 = vmatprep.subr.mxu0 0.0
        %816 = vmatpush1.xpose.msra.mxu0 0.0
        %817 = vmatprep.subr.mxu0 0.0
        %818 = vmatpush1.xpose.msra.mxu0 0.0
        %819 = vmatprep.subr.mxu0 0.0
        %820 = vmatpush1.xpose.msra.mxu0 0.0
        %821 = vmatprep.subr.mxu0 0.0
        %822 = vmatpush1.xpose.msra.mxu0 0.0
        %823 = vmatprep.subr.mxu0 0.0
        %824 = vmatpush1.xpose.msra.mxu0 0.0
        %825 = vmatprep.subr.mxu0 0.0
        %826 = vmatpush1.xpose.msra.mxu0 0.0
        %827 = vmatprep.subr.mxu0 0.0
        %828 = vmatpush1.xpose.msra.mxu0 0.0
        %829 = vmatprep.subr.mxu0 0.0
        %830 = vmatpush1.xpose.msra.mxu0 0.0
        %831 = vmatprep.subr.mxu0 0.0
        %832 = vmatpush1.xpose.msra.mxu0 0.0
        %833 = vmatprep.subr.mxu0 0.0
        %834 = vmatpush1.xpose.msra.mxu0 0.0
        %835 = vmatprep.subr.mxu0 0.0
        %836 = vmatpush1.xpose.msra.mxu0 0.0
        %837 = vmatprep.subr.mxu0 0.0
        %838 = vmatpush1.xpose.msra.mxu0 0.0
        %839 = vmatprep.subr.mxu0 0.0
        %840 = vmatpush1.xpose.msra.mxu0 0.0
        %841 = vmatprep.subr.mxu0 0.0
        %842 = vmatpush1.xpose.msra.mxu0 0.0
        %843 = vmatprep.subr.mxu0 0.0
        %844 = vmatpush1.xpose.msra.mxu0 0.0
        %845 = vmatprep.subr.mxu0 0.0
        %846 = vmatpush1.xpose.msra.mxu0 0.0
        %847 = vmatprep.subr.mxu0 0.0
        %848 = vmatpush1.xpose.msra.mxu0 0.0
        %849 = vmatprep.subr.mxu0 0.0
        %850 = vmatpush1.xpose.msra.mxu0 0.0
        %851 = vmatprep.mubr.f32.mxu0 0.0
        %852 = vmatmul.mubr.f32.gmra.mrb[0].mxu0 %v783
        %v853 = vpop.f32.mrb[0].mxu0
        %v854 = vadd.f32 %v394, %v853
        %v855 = vpop.f32.mrb[0].mxu0
        %856 = vdwg.mxu0
        %v857 = vld [vmem:[#allocation4] sm:$0xff]
        %v858 = vsel %vm474, %v854, -inf
        %859 = vmax.xlane.f32.xlu0 %v858
        %v860 = vpop.xlane.xlu0 %859
        %v861 = vmax.f32 %v857, %v860
        %v862 = vsub.f32 %v857, %v861
        %v863 = vmul.f32 %v862, 1.442695
        %v864 = vpow.pop %v863
        %866 = vset.pattern.permute.xlu0 2
        %867 = vperm.xlu0 %866, %v861
        %v868 = vpop.permute.xlu0 %867
        %v870 = vsub.f32 %v854, %v868
        %v871 = vmul.f32 %v870, 1.442695
        %v872 = vpow.pop %v871
        %v873 = vld [vmem:[#allocation5] sm:$0xff]
        %v874 = vmul.f32 %v864, %v873
        %v875 = vsel %vm474, %v872, 0.0
        %876 = vadd.xlane.f32.xlu0 %v875
        %v877 = vpop.xlane.xlu0 %876
        %v878 = vadd.f32 %v874, %v877
        %vm879 = vcmask 23568
        %880 = vst.msk [vmem:[#allocation5] sm:$0xff] %vm879, %v878
        %s881 = scalar_lea.vmem [#allocation3], 16
        %v882 = vld [vmem:[%s881] sm:$0xff]
        %884 = vset.pattern.permute.xlu0 2
        %885 = vperm.xlu0 %884, %v864
        %v886 = vpop.permute.xlu0 %885
        %v888 = vmul.f32 %v886, %v882
        %890 = vrot.lane.b32.xlu0 %v778, 64
        %v891 = vpop.permute.xlu0 %890
        %v894 = vsel %vm474, %v872, 0
        %896 = vmatprep.subr.mxu0 0.0
        %897 = vmatpush1.msra.mxu0 %v891
        %898 = vmatprep.subr.mxu0 0.0
        %899 = vmatpush1.msra.mxu0 0.0
        %900 = vmatprep.subr.mxu0 0.0
        %901 = vmatpush1.msra.mxu0 0.0
        %902 = vmatprep.subr.mxu0 0.0
        %903 = vmatpush1.msra.mxu0 0.0
        %904 = vmatprep.subr.mxu0 0.0
        %905 = vmatpush1.msra.mxu0 0.0
        %906 = vmatprep.subr.mxu0 0.0
        %907 = vmatpush1.msra.mxu0 0.0
        %908 = vmatprep.subr.mxu0 0.0
        %909 = vmatpush1.msra.mxu0 0.0
        %910 = vmatprep.subr.mxu0 0.0
        %911 = vmatpush1.msra.mxu0 0.0
        %912 = vmatprep.subr.mxu0 0.0
        %913 = vmatpush1.msra.mxu0 0.0
        %914 = vmatprep.subr.mxu0 0.0
        %915 = vmatpush1.msra.mxu0 0.0
        %916 = vmatprep.subr.mxu0 0.0
        %917 = vmatpush1.msra.mxu0 0.0
        %918 = vmatprep.subr.mxu0 0.0
        %919 = vmatpush1.msra.mxu0 0.0
        %920 = vmatprep.subr.mxu0 0.0
        %921 = vmatpush1.msra.mxu0 0.0
        %922 = vmatprep.subr.mxu0 0.0
        %923 = vmatpush1.msra.mxu0 0.0
        %924 = vmatprep.subr.mxu0 0.0
        %925 = vmatpush1.msra.mxu0 0.0
        %926 = vmatprep.subr.mxu0 0.0
        %927 = vmatpush1.msra.mxu0 0.0
        %928 = vmatprep.subr.mxu0 0.0
        %929 = vmatpush1.msra.mxu0 0.0
        %930 = vmatprep.subr.mxu0 0.0
        %931 = vmatpush1.msra.mxu0 0.0
        %932 = vmatprep.subr.mxu0 0.0
        %933 = vmatpush1.msra.mxu0 0.0
        %934 = vmatprep.subr.mxu0 0.0
        %935 = vmatpush1.msra.mxu0 0.0
        %936 = vmatprep.subr.mxu0 0.0
        %937 = vmatpush1.msra.mxu0 0.0
        %938 = vmatprep.subr.mxu0 0.0
        %939 = vmatpush1.msra.mxu0 0.0
        %940 = vmatprep.subr.mxu0 0.0
        %941 = vmatpush1.msra.mxu0 0.0
        %942 = vmatprep.subr.mxu0 0.0
        %943 = vmatpush1.msra.mxu0 0.0
        %944 = vmatprep.subr.mxu0 0.0
        %945 = vmatpush1.msra.mxu0 0.0
        %946 = vmatprep.subr.mxu0 0.0
        %947 = vmatpush1.msra.mxu0 0.0
        %948 = vmatprep.subr.mxu0 0.0
        %949 = vmatpush1.msra.mxu0 0.0
        %950 = vmatprep.subr.mxu0 0.0
        %951 = vmatpush1.msra.mxu0 0.0
        %952 = vmatprep.subr.mxu0 0.0
        %953 = vmatpush1.msra.mxu0 0.0
        %954 = vmatprep.subr.mxu0 0.0
        %955 = vmatpush1.msra.mxu0 0.0
        %956 = vmatprep.subr.mxu0 0.0
        %957 = vmatpush1.msra.mxu0 0.0
        %958 = vmatprep.subr.mxu0 0.0
        %959 = vmatpush1.msra.mxu0 0.0
        %960 = vmatprep.mubr.f32.mxu0 0.0
        %961 = vmatmul.mubr.f32.gmra.mrb[0].mxu0 %v894
        %v962 = vpop.f32.mrb[0].mxu0
        %v963 = vadd.f32 0.0, %v962
        %v964 = vpop.f32.mrb[0].mxu0
        %965 = vdwg.mxu0
        %v966 = vadd.f32 %v888, %v963
        %967 = vst.msk [vmem:[%s881] sm:$0xff] %vm396, %v966
        %968 = vst.msk [vmem:[#allocation4] sm:$0xff] %vm879, %v861
        %s969 = scalar_lea.vmem [#allocation2], 24
        %v970 = vld [vmem:[%s969] sm:$0xff]
        %v971 = vld [vmem:[%s291] sm:$0xff]
        %v972 = vld [vmem:[%s300] sm:$0xff]
        %974 = vrot.lane.b32.xlu0 %v971, 32
        %v975 = vpop.permute.xlu0 %974
        %v977 = vsel %vm396, %v970, 0
        %v979 = vsel %vm396, %v975, 0
        %981 = vmatprep.subr.mxu0 0.0
        %982 = vmatpush1.xpose.msra.mxu0 %v979
        %983 = vmatprep.subr.mxu0 0.0
        %984 = vmatpush1.xpose.msra.mxu0 0.0
        %985 = vmatprep.subr.mxu0 0.0
        %986 = vmatpush1.xpose.msra.mxu0 0.0
        %987 = vmatprep.subr.mxu0 0.0
        %988 = vmatpush1.xpose.msra.mxu0 0.0
        %989 = vmatprep.subr.mxu0 0.0
        %990 = vmatpush1.xpose.msra.mxu0 0.0
        %991 = vmatprep.subr.mxu0 0.0
        %992 = vmatpush1.xpose.msra.mxu0 0.0
        %993 = vmatprep.subr.mxu0 0.0
        %994 = vmatpush1.xpose.msra.mxu0 0.0
        %995 = vmatprep.subr.mxu0 0.0
        %996 = vmatpush1.xpose.msra.mxu0 0.0
        %997 = vmatprep.subr.mxu0 0.0
        %998 = vmatpush1.xpose.msra.mxu0 0.0
        %999 = vmatprep.subr.mxu0 0.0
        %1000 = vmatpush1.xpose.msra.mxu0 0.0
        %1001 = vmatprep.subr.mxu0 0.0
        %1002 = vmatpush1.xpose.msra.mxu0 0.0
        %1003 = vmatprep.subr.mxu0 0.0
        %1004 = vmatpush1.xpose.msra.mxu0 0.0
        %1005 = vmatprep.subr.mxu0 0.0
        %1006 = vmatpush1.xpose.msra.mxu0 0.0
        %1007 = vmatprep.subr.mxu0 0.0
        %1008 = vmatpush1.xpose.msra.mxu0 0.0
        %1009 = vmatprep.subr.mxu0 0.0
        %1010 = vmatpush1.xpose.msra.mxu0 0.0
        %1011 = vmatprep.subr.mxu0 0.0
        %1012 = vmatpush1.xpose.msra.mxu0 0.0
        %1013 = vmatprep.subr.mxu0 0.0
        %1014 = vmatpush1.xpose.msra.mxu0 0.0
        %1015 = vmatprep.subr.mxu0 0.0
        %1016 = vmatpush1.xpose.msra.mxu0 0.0
        %1017 = vmatprep.subr.mxu0 0.0
        %1018 = vmatpush1.xpose.msra.mxu0 0.0
        %1019 = vmatprep.subr.mxu0 0.0
        %1020 = vmatpush1.xpose.msra.mxu0 0.0
        %1021 = vmatprep.subr.mxu0 0.0
        %1022 = vmatpush1.xpose.msra.mxu0 0.0
        %1023 = vmatprep.subr.mxu0 0.0
        %1024 = vmatpush1.xpose.msra.mxu0 0.0
        %1025 = vmatprep.subr.mxu0 0.0
        %1026 = vmatpush1.xpose.msra.mxu0 0.0
        %1027 = vmatprep.subr.mxu0 0.0
        %1028 = vmatpush1.xpose.msra.mxu0 0.0
        %1029 = vmatprep.subr.mxu0 0.0
        %1030 = vmatpush1.xpose.msra.mxu0 0.0
        %1031 = vmatprep.subr.mxu0 0.0
        %1032 = vmatpush1.xpose.msra.mxu0 0.0
        %1033 = vmatprep.subr.mxu0 0.0
        %1034 = vmatpush1.xpose.msra.mxu0 0.0
        %1035 = vmatprep.subr.mxu0 0.0
        %1036 = vmatpush1.xpose.msra.mxu0 0.0
        %1037 = vmatprep.subr.mxu0 0.0
        %1038 = vmatpush1.xpose.msra.mxu0 0.0
        %1039 = vmatprep.subr.mxu0 0.0
        %1040 = vmatpush1.xpose.msra.mxu0 0.0
        %1041 = vmatprep.subr.mxu0 0.0
        %1042 = vmatpush1.xpose.msra.mxu0 0.0
        %1043 = vmatprep.subr.mxu0 0.0
        %1044 = vmatpush1.xpose.msra.mxu0 0.0
        %1045 = vmatprep.mubr.f32.mxu0 0.0
        %1046 = vmatmul.mubr.f32.gmra.mrb[0].mxu0 %v977
        %v1047 = vpop.f32.mrb[0].mxu0
        %v1048 = vadd.f32 %v394, %v1047
        %v1049 = vpop.f32.mrb[0].mxu0
        %1050 = vdwg.mxu0
        %v1051 = vld [vmem:[#allocation4] sm:$0xff]
        %v1052 = vsel %vm474, %v1048, -inf
        %1053 = vmax.xlane.f32.xlu0 %v1052
        %v1054 = vpop.xlane.xlu0 %1053
        %v1055 = vmax.f32 %v1051, %v1054
        %v1056 = vsub.f32 %v1051, %v1055
        %v1057 = vmul.f32 %v1056, 1.442695
        %v1058 = vpow.pop %v1057
        %1060 = vset.pattern.permute.xlu0 3
        %1061 = vperm.xlu0 %1060, %v1055
        %v1062 = vpop.permute.xlu0 %1061
        %v1064 = vsub.f32 %v1048, %v1062
        %v1065 = vmul.f32 %v1064, 1.442695
        %v1066 = vpow.pop %v1065
        %v1067 = vld [vmem:[#allocation5] sm:$0xff]
        %v1068 = vmul.f32 %v1058, %v1067
        %v1069 = vsel %vm474, %v1066, 0.0
        %1070 = vadd.xlane.f32.xlu0 %v1069
        %v1071 = vpop.xlane.xlu0 %1070
        %v1072 = vadd.f32 %v1068, %v1071
        %vm1073 = vcmask 31768
        %1074 = vst.msk [vmem:[#allocation5] sm:$0xff] %vm1073, %v1072
        %s1075 = scalar_lea.vmem [#allocation3], 24
        %v1076 = vld [vmem:[%s1075] sm:$0xff]
        %1078 = vset.pattern.permute.xlu0 3
        %1079 = vperm.xlu0 %1078, %v1058
        %v1080 = vpop.permute.xlu0 %1079
        %v1082 = vmul.f32 %v1080, %v1076
        %1084 = vrot.lane.b32.xlu0 %v972, 32
        %v1085 = vpop.permute.xlu0 %1084
        %v1088 = vsel %vm474, %v1066, 0
        %1090 = vmatprep.subr.mxu0 0.0
        %1091 = vmatpush1.msra.mxu0 %v1085
        %1092 = vmatprep.subr.mxu0 0.0
        %1093 = vmatpush1.msra.mxu0 0.0
        %1094 = vmatprep.subr.mxu0 0.0
        %1095 = vmatpush1.msra.mxu0 0.0
        %1096 = vmatprep.subr.mxu0 0.0
        %1097 = vmatpush1.msra.mxu0 0.0
        %1098 = vmatprep.subr.mxu0 0.0
        %1099 = vmatpush1.msra.mxu0 0.0
        %1100 = vmatprep.subr.mxu0 0.0
        %1101 = vmatpush1.msra.mxu0 0.0
        %1102 = vmatprep.subr.mxu0 0.0
        %1103 = vmatpush1.msra.mxu0 0.0
        %1104 = vmatprep.subr.mxu0 0.0
        %1105 = vmatpush1.msra.mxu0 0.0
        %1106 = vmatprep.subr.mxu0 0.0
        %1107 = vmatpush1.msra.mxu0 0.0
        %1108 = vmatprep.subr.mxu0 0.0
        %1109 = vmatpush1.msra.mxu0 0.0
        %1110 = vmatprep.subr.mxu0 0.0
        %1111 = vmatpush1.msra.mxu0 0.0
        %1112 = vmatprep.subr.mxu0 0.0
        %1113 = vmatpush1.msra.mxu0 0.0
        %1114 = vmatprep.subr.mxu0 0.0
        %1115 = vmatpush1.msra.mxu0 0.0
        %1116 = vmatprep.subr.mxu0 0.0
        %1117 = vmatpush1.msra.mxu0 0.0
        %1118 = vmatprep.subr.mxu0 0.0
        %1119 = vmatpush1.msra.mxu0 0.0
        %1120 = vmatprep.subr.mxu0 0.0
        %1121 = vmatpush1.msra.mxu0 0.0
        %1122 = vmatprep.subr.mxu0 0.0
        %1123 = vmatpush1.msra.mxu0 0.0
        %1124 = vmatprep.subr.mxu0 0.0
        %1125 = vmatpush1.msra.mxu0 0.0
        %1126 = vmatprep.subr.mxu0 0.0
        %1127 = vmatpush1.msra.mxu0 0.0
        %1128 = vmatprep.subr.mxu0 0.0
        %1129 = vmatpush1.msra.mxu0 0.0
        %1130 = vmatprep.subr.mxu0 0.0
        %1131 = vmatpush1.msra.mxu0 0.0
        %1132 = vmatprep.subr.mxu0 0.0
        %1133 = vmatpush1.msra.mxu0 0.0
        %1134 = vmatprep.subr.mxu0 0.0
        %1135 = vmatpush1.msra.mxu0 0.0
        %1136 = vmatprep.subr.mxu0 0.0
        %1137 = vmatpush1.msra.mxu0 0.0
        %1138 = vmatprep.subr.mxu0 0.0
        %1139 = vmatpush1.msra.mxu0 0.0
        %1140 = vmatprep.subr.mxu0 0.0
        %1141 = vmatpush1.msra.mxu0 0.0
        %1142 = vmatprep.subr.mxu0 0.0
        %1143 = vmatpush1.msra.mxu0 0.0
        %1144 = vmatprep.subr.mxu0 0.0
        %1145 = vmatpush1.msra.mxu0 0.0
        %1146 = vmatprep.subr.mxu0 0.0
        %1147 = vmatpush1.msra.mxu0 0.0
        %1148 = vmatprep.subr.mxu0 0.0
        %1149 = vmatpush1.msra.mxu0 0.0
        %1150 = vmatprep.subr.mxu0 0.0
        %1151 = vmatpush1.msra.mxu0 0.0
        %1152 = vmatprep.subr.mxu0 0.0
        %1153 = vmatpush1.msra.mxu0 0.0
        %1154 = vmatprep.mubr.f32.mxu0 0.0
        %1155 = vmatmul.mubr.f32.gmra.mrb[0].mxu0 %v1088
        %v1156 = vpop.f32.mrb[0].mxu0
        %v1157 = vadd.f32 0.0, %v1156
        %v1158 = vpop.f32.mrb[0].mxu0
        %1159 = vdwg.mxu0
        %v1160 = vadd.f32 %v1082, %v1157
        %1161 = vst.msk [vmem:[%s1075] sm:$0xff] %vm396, %v1160
        %1162 = vst.msk [vmem:[#allocation4] sm:$0xff] %vm1073, %v1055
        // Predicated region
        $region53: #{tpu_custom_call.1} parent=35 // pred_check
          %p1163 = pneg %p347
        $region54: #{tpu_custom_call.1} parent=35 // pred_check_branch
          %1165 = sbr.rel (%p1163) target = $region56
        $region55: #{tpu_custom_call.1} parent=35 // pred_region
          %v1166 = vld [vmem:[#allocation5] sm:$0xff]
          %v1167 = vrcp.pop %v1166
          %v1168 = vld [vmem:[#allocation3] sm:$0xff]
          %1170 = vset.pattern.permute.xlu0 0
          %1171 = vperm.xlu0 %1170, %v1167
          %v1172 = vpop.permute.xlu0 %1171
          %v1174 = vmul.f32 %v1168, %v1172
          %1175 = vst.msk [vmem:[%s340] sm:$0xff] %vm396, %v1174
          %v1176 = vld [vmem:[#allocation5] sm:$0xff]
          %v1177 = vrcp.pop %v1176
          %v1178 = vld [vmem:[%s687] sm:$0xff]
          %1180 = vset.pattern.permute.xlu0 1
          %1181 = vperm.xlu0 %1180, %v1177
          %v1182 = vpop.permute.xlu0 %1181
          %v1184 = vmul.f32 %v1178, %v1182
          %1186 = vrot.lane.b32.xlu0 %v1184, 32
          %v1187 = vpop.permute.xlu0 %1186
          %vm1189 = vcmask 523520
          %1190 = vst.msk [vmem:[%s340] sm:$0xff] %vm1189, %v1187
          %v1191 = vld [vmem:[#allocation5] sm:$0xff]
          %v1192 = vrcp.pop %v1191
          %v1193 = vld [vmem:[%s881] sm:$0xff]
          %1195 = vset.pattern.permute.xlu0 2
          %1196 = vperm.xlu0 %1195, %v1192
          %v1197 = vpop.permute.xlu0 %1196
          %v1199 = vmul.f32 %v1193, %v1197
          %1201 = vrot.lane.b32.xlu0 %v1199, 64
          %v1202 = vpop.permute.xlu0 %1201
          %vm1204 = vcmask 785920
          %1205 = vst.msk [vmem:[%s340] sm:$0xff] %vm1204, %v1202
          %v1206 = vld [vmem:[#allocation5] sm:$0xff]
          %v1207 = vrcp.pop %v1206
          %v1208 = vld [vmem:[%s1075] sm:$0xff]
          %1210 = vset.pattern.permute.xlu0 3
          %1211 = vperm.xlu0 %1210, %v1207
          %v1212 = vpop.permute.xlu0 %1211
          %v1214 = vmul.f32 %v1208, %v1212
          %1216 = vrot.lane.b32.xlu0 %v1214, 96
          %v1217 = vpop.permute.xlu0 %1216
          %vm1219 = vcmask 1048320
          %1220 = vst.msk [vmem:[%s340] sm:$0xff] %vm1219, %v1217
        $region56: #{tpu_custom_call.1} parent=35 // pred_fallthru
          _
        %s1221 = sand.u32 %s165, 1
        %s1222 = scalar_lea.sflag [#allocation8], %s1221
        %s1223 = sand.u32 %s165, 1
        %s1224 = smul.addr %s1223, 8
        %s1225 = scalar_lea.vmem [#allocation12], %s1224
        // Predicated region
        $region57: #{tpu_custom_call.1} parent=35 // pred_check
          %p1226 = pneg %p175
        $region58: #{tpu_custom_call.1} parent=35 // pred_check_branch
          %1228 = sbr.rel (%p1226) target = $region60
        $region59: #{tpu_custom_call.1} parent=35 // pred_region
          %s1230 = ssub.s32 128, 128
          %1231 = vsyncadd %s1222, %s1230
          %s1232 = sadd.s32 %s30, %s29
          %s1233 = smul.addr %s1232, 128
          %s1234 = scalar_lea.hbm %s4, %s1233
          %s1236 = sshll.u32 %s1225, 4
          %s1237 = int_to_ptr.vmem [resolvable:$true] %s1236
          %1239 = dma.vmem_to_hbm [thread:$0]  %s1237, 128, %s1234, %s1222
        $region60: #{tpu_custom_call.1} parent=35 // pred_fallthru
          _
      $region36: #{tpu_custom_call.1} parent=5 // pred_fallthru
        _
      %p1240 = scmp.le.s32.totalorder 2, %s19
      // Predicated region
      $region61: #{tpu_custom_call.1} parent=5 // pred_check
        %p1241 = pneg %p1240
      $region62: #{tpu_custom_call.1} parent=5 // pred_check_branch
        %1243 = sbr.rel (%p1241) target = $region64
      $region63: #{tpu_custom_call.1} parent=5 // pred_region
        %s1244 = ssub.s32 %s19, 2
        // Predicated region
        $region65: #{tpu_custom_call.1} parent=63 // pred_check
          %p1245 = pneg %p181
        $region66: #{tpu_custom_call.1} parent=63 // pred_check_branch
          %1247 = sbr.rel (%p1245) target = $region68
        $region67: #{tpu_custom_call.1} parent=63 // pred_region
          %s1248 = sand.u32 %s166, 1
          %s1249 = scalar_lea.sflag [#allocation8], %s1248
          %s1250 = sand.u32 %s166, 1
          %s1251 = smul.addr %s1250, 8
          %s1252 = scalar_lea.vmem [#allocation12], %s1251
          %1253 = dma.done %s1249, 128
        $region68: #{tpu_custom_call.1} parent=63 // pred_fallthru
          _
      $region64: #{tpu_custom_call.1} parent=5 // pred_fallthru
        _
    $region6: #{tpu_custom_call.1} parent=1 // loop_footer
      %s23 = sadd.s32 1, %s19
    $region7: #{tpu_custom_call.1} parent=1 // loop_footer_branch
      %18 = sbr.rel target = $region3
    $region8: #{tpu_custom_call.1} parent=1 // loop_exit
      _
    %1254 = vsyncpa [#allocation7], 1
    %s1255 = scalar_lea.sflag [#allocation7], 1
    %1256 = vsyncpa %s1255, 1
    %1257 = vsyncpa [#allocation10], 1
    %s1258 = scalar_lea.sflag [#allocation10], 1
    %1259 = vsyncpa %s1258, 1
    %1260 = vsyncpa [#allocation8], 1
    %s1261 = scalar_lea.sflag [#allocation8], 1
    %1262 = vsyncpa %s1261, 1

</llo_original>
